<compile_context>
chip_gen: v6e
topology: v6e:2x2x1
jax: 0.10.0
libtpu: 0.0.40
codegen_flags: <defaults>
</compile_context>

<pallas_src>
import math

import jax
import jax.numpy as jnp
from jax import lax
from jax.experimental import pallas as pl
from jax.experimental.pallas import tpu as pltpu

HIGHEST = lax.Precision.HIGHEST


# ----------------------------- Pallas kernel ------------------------------- #

def _make_decoder_kernel(n_layers: int, hid: int):
    """Build the fused AttnDecoder kernel for a given layer count / hidden size."""
    H2 = 2 * hid  # bidirectional hidden width (lane-dense, 128 in the example)

    def kernel(*refs):
        it = iter(refs)
        emb_ref = next(it)             # (B, E)   bf16 embedded tokens
        h0_ref = next(it)              # (n_layers, B, 2H) f32  [dir0 | dir1] per layer
        enc_ref = next(it)             # (B, T, 2H) f32 encoder outputs
        gru_refs = [[next(it) for _ in range(5)] for _ in range(n_layers)]
        wqc_ref = next(it)             # (2H, 4H) bf16  [W_a | W_c(gru half)]
        ba_ref = next(it)              # (1, 2H)  f32   attn Linear bias
        wc2_ref = next(it)             # (2H, 2H) bf16  concat-weight half for context
        bc_ref = next(it)              # (1, 2H)  f32
        wo_ref = next(it)              # (2H, V)  bf16
        bo_ref = next(it)              # (1, V)   f32
        logp_ref = next(it)            # (B, V)   out: log-probabilities
        hid_ref = next(it)             # (n_layers, B, 2H) out: new hidden (lane-dense)
        attnw_ref = next(it)           # (B, T)   out: attention weights

        # ---- one-timestep stacked bidirectional GRU (2 fused matmuls / layer) ----
        x = emb_ref[...]
        for l in range(n_layers):
            wih_ref, whh_ref, brz_ref, bin_ref, bhn_ref = gru_refs[l]
            h_prev = h0_ref[l]                                             # (B, 2H) f32
            gi = jnp.dot(x.astype(jnp.bfloat16), wih_ref[...],
                         preferred_element_type=jnp.float32)               # (B, 6H)
            gh = jnp.dot(h_prev.astype(jnp.bfloat16), whh_ref[...],
                         preferred_element_type=jnp.float32)               # (B, 6H)
            # gate layout: [r_d0|r_d1|z_d0|z_d1|n_d0|n_d1], each H wide
            rz = jax.nn.sigmoid(gi[:, :2 * H2] + gh[:, :2 * H2] + brz_ref[...])
            r, z = rz[:, :H2], rz[:, H2:]
            n = jnp.tanh(gi[:, 2 * H2:] + bin_ref[...]
                         + r * (gh[:, 2 * H2:] + bhn_ref[...]))
            h_new = (1.0 - z) * n + z * h_prev                             # (B, 2H) f32
            hid_ref[l] = h_new                                             # lane-dense store
            x = h_new                                                      # next layer input
        gru_out = x                                                        # (B, 2H) f32

        # ---- Luong 'general' attention (score re-associated onto one matmul) ----
        qc = jnp.dot(gru_out.astype(jnp.bfloat16), wqc_ref[...],
                     preferred_element_type=jnp.float32)                   # (B, 4H)
        q = qc[:, :H2]                                                     # gru_out @ W_a
        gpart = qc[:, H2:]                                                 # gru_out @ W_c1
        c = jnp.sum(gru_out * ba_ref[...], axis=1, keepdims=True)          # (B, 1)
        enc = enc_ref[...]                                                 # (B, T, 2H)
        scores = jnp.sum(enc * q[:, None, :], axis=2) + c                  # (B, T)
        smax = jnp.max(scores, axis=1, keepdims=True)
        e = jnp.exp(scores - smax)
        denom = jnp.sum(e, axis=1, keepdims=True)
        w = e * pl.reciprocal(denom, approx=True)                          # softmax (B, T)
        attnw_ref[...] = w
        context = jnp.sum(w[:, :, None] * enc, axis=1)                     # (B, 2H)

        # ---- concat -> tanh -> out -> log_softmax ----
        cat = jnp.tanh(gpart
                       + jnp.dot(context.astype(jnp.bfloat16), wc2_ref[...],
                                 preferred_element_type=jnp.float32)
                       + bc_ref[...])                                      # (B, 2H)
        logits = jnp.dot(cat.astype(jnp.bfloat16), wo_ref[...],
                         preferred_element_type=jnp.float32) + bo_ref[...]
        lmax = jnp.max(logits, axis=1, keepdims=True)
        shifted = logits - lmax
        logp_ref[...] = shifted - jnp.log(jnp.sum(jnp.exp(shifted), axis=1, keepdims=True))

    return kernel


# --------------------------- weight repacking -------------------------------- #

def _pack_gru_layer(gru, l, hid):
    """PyTorch (3H, in) GRU weights for both directions of layer l -> fused layout.

    Returns (all lane-aligned for H2 = 2*hid):
      wih : (in, 6H) bf16   x @ wih   with columns [r_d0|r_d1|z_d0|z_d1|n_d0|n_d1]
      whh : (2H, 6H) bf16   h_cat @ whh, block-diagonal per direction, same columns
      b_rz: (1, 4H) f32     pre-folded b_ih + b_hh for the r and z gates
      b_in: (1, 2H) f32     b_ih for the n gate
      b_hn: (1, 2H) f32     b_hh for the n gate (must stay inside r*(...))
    """
    H = hid
    w_ih0, w_hh0, b_ih0, b_hh0 = gru[(l, 0)]
    w_ih1, w_hh1, b_ih1, b_hh1 = gru[(l, 1)]

    def gate(w, g):                    # (3H, K) -> (K, H) for gate g (r=0, z=1, n=2)
        return w[g * H:(g + 1) * H, :].T

    def gateb(b, g):
        return b[g * H:(g + 1) * H]

    wih = jnp.concatenate(
        [gate(w_ih0 if d == 0 else w_ih1, g) for g in range(3) for d in range(2)],
        axis=1)                                                            # (in, 6H)

    zeros = jnp.zeros((H, H), jnp.float32)
    blocks = []
    for g in range(3):
        top = jnp.concatenate([gate(w_hh0, g), zeros], axis=1)             # dir0 rows
        bot = jnp.concatenate([zeros, gate(w_hh1, g)], axis=1)             # dir1 rows
        blocks.append(jnp.concatenate([top, bot], axis=0))                 # (2H, 2H)
    whh = jnp.concatenate(blocks, axis=1)                                  # (2H, 6H)

    b_rz = jnp.concatenate([gateb(b_ih0, 0) + gateb(b_hh0, 0),
                            gateb(b_ih1, 0) + gateb(b_hh1, 0),
                            gateb(b_ih0, 1) + gateb(b_hh0, 1),
                            gateb(b_ih1, 1) + gateb(b_hh1, 1)]).reshape(1, 4 * H)
    b_in = jnp.concatenate([gateb(b_ih0, 2), gateb(b_ih1, 2)]).reshape(1, 2 * H)
    b_hn = jnp.concatenate([gateb(b_hh0, 2), gateb(b_hh1, 2)]).reshape(1, 2 * H)
    return (wih.astype(jnp.bfloat16), whh.astype(jnp.bfloat16), b_rz, b_in, b_hn)


# ------------------------------- JAX wrapper -------------------------------- #

def attn_decoder_pallas(params, tokens, last_hidden, encoder_outputs, n_layers, hid):
    """Mirrors AttnDecoder.forward (eval mode): returns (log_probs, hidden, attn_weights)."""
    # Embedding lookup (+ eval-mode dropout = identity); cast once to bf16 for the MXU.
    emb = params["embedding"][tokens].astype(jnp.bfloat16)                 # (B, E)
    enc_bt = jnp.transpose(encoder_outputs, (1, 0, 2))                     # (B, T, 2H)
    B, T, H2 = enc_bt.shape
    V = params["out_w"].shape[0]
    E = emb.shape[1]

    # hidden repacked lane-dense: (n_layers, B, 2H) with [dir0 | dir1] per layer
    h0 = jnp.concatenate([last_hidden[0::2], last_hidden[1::2]], axis=-1)

    inputs = [emb, h0, enc_bt]
    for l in range(n_layers):
        inputs.extend(_pack_gru_layer(params["gru"], l, hid))

    # fuse attn Linear and the gru_out half of the concat Linear into one matmul
    wqc = jnp.concatenate([params["attn_w"], params["cat_w"][:, :H2].T],
                          axis=1).astype(jnp.bfloat16)                     # (2H, 4H)
    inputs.extend([
        wqc,
        params["attn_b"].reshape(1, H2),
        params["cat_w"][:, H2:].T.astype(jnp.bfloat16),                    # (2H, 2H) context half
        params["cat_b"].reshape(1, H2),
        params["out_w"].T.astype(jnp.bfloat16),                            # (2H, V)
        params["out_b"].reshape(1, V),
    ])

    # advisory cost estimate (lets XLA schedule surrounding HLO around the small call)
    flops = 0
    for l in range(n_layers):
        in_dim = E if l == 0 else H2
        flops += 2 * B * in_dim * 3 * H2 + 2 * B * H2 * 3 * H2
    flops += 2 * B * H2 * 2 * H2 + 2 * B * H2 * H2 + 2 * B * H2 * V + 2 * B * T * H2 * 2
    transcendentals = n_layers * B * 3 * H2 + B * T + B * V + 2 * B
    out_bytes = 4 * (B * V + n_layers * B * H2 + B * T)
    bytes_accessed = int(sum(int(a.size) * a.dtype.itemsize for a in inputs)) + out_bytes

    vmem = pl.BlockSpec(memory_space=pltpu.MemorySpace.VMEM)
    logp, hid_pk, attn_w = pl.pallas_call(
        _make_decoder_kernel(n_layers, hid),
        out_shape=(jax.ShapeDtypeStruct((B, V), jnp.float32),
                   jax.ShapeDtypeStruct((n_layers, B, H2), jnp.float32),
                   jax.ShapeDtypeStruct((B, T), jnp.float32)),
        in_specs=[vmem] * len(inputs),
        out_specs=(vmem, vmem, vmem),
        cost_estimate=pl.CostEstimate(flops=flops,
                                      transcendentals=transcendentals,
                                      bytes_accessed=bytes_accessed),
    )(*inputs)

    # lane-dense (n_layers, B, 2H) -> PyTorch layout (2*n_layers, B, H)
    hid_out = hid_pk.reshape(n_layers, B, 2, hid).transpose(0, 2, 1, 3) \
                    .reshape(2 * n_layers, B, hid)
    return logp, hid_out, attn_w[:, None, :]                              # attn: (B, 1, T)


# ---------------------------- pure-JAX reference ---------------------------- #

def attn_decoder_ref(params, tokens, last_hidden, encoder_outputs, n_layers, hid):
    H = hid
    x = params["embedding"][tokens]                                        # (B, E)
    hids = []
    for l in range(n_layers):
        outs = []
        for d in range(2):
            w_ih, w_hh, b_ih, b_hh = params["gru"][(l, d)]
            h0 = last_hidden[2 * l + d]
            gi = jnp.dot(x, w_ih.T, precision=HIGHEST) + b_ih
            gh = jnp.dot(h0, w_hh.T, precision=HIGHEST) + b_hh
            r = jax.nn.sigmoid(gi[:, :H] + gh[:, :H])
            z = jax.nn.sigmoid(gi[:, H:2 * H] + gh[:, H:2 * H])
            n = jnp.tanh(gi[:, 2 * H:] + r * gh[:, 2 * H:])
            h_new = (1.0 - z) * n + z * h0
            outs.append(h_new)
            hids.append(h_new)
        x = jnp.concatenate(outs, axis=1)
    gru_out = x                                                            # (B, 2H)

    energy = jnp.einsum("tbk,hk->tbh", encoder_outputs, params["attn_w"],
                        precision=HIGHEST) + params["attn_b"]
    scores = jnp.sum(gru_out[None, :, :] * energy, axis=2)                 # (T, B)
    attn_w = jax.nn.softmax(scores.T, axis=1)                              # (B, T)
    context = jnp.einsum("bt,tbh->bh", attn_w, encoder_outputs, precision=HIGHEST)

    concat_in = jnp.concatenate([gru_out, context], axis=1)                # (B, 4H)
    cat = jnp.tanh(jnp.dot(concat_in, params["cat_w"].T, precision=HIGHEST) + params["cat_b"])
    logits = jnp.dot(cat, params["out_w"].T, precision=HIGHEST) + params["out_b"]
    logp = jax.nn.log_softmax(logits, axis=1)
    return logp, jnp.stack(hids, axis=0), attn_w[:, None, :]


# --------------------------------- params ----------------------------------- #

def init_params(key, vocab, emb_dim, hid, n_layers):
    ks = iter(jax.random.split(key, 8 + 8 * n_layers))
    p = {"embedding": jax.random.normal(next(ks), (vocab, emb_dim), jnp.float32)}
    bound = 1.0 / math.sqrt(hid)
    gru = {}
    for l in range(n_layers):
        in_dim = emb_dim if l == 0 else 2 * hid
        for d in range(2):
            gru[(l, d)] = (
                jax.random.uniform(next(ks), (3 * hid, in_dim), jnp.float32, -bound, bound),
                jax.random.uniform(next(ks), (3 * hid, hid), jnp.float32, -bound, bound),
                jax.random.uniform(next(ks), (3 * hid,), jnp.float32, -bound, bound),
                jax.random.uniform(next(ks), (3 * hid,), jnp.float32, -bound, bound),
            )
    p["gru"] = gru
    h2 = 2 * hid
    ba = 1.0 / math.sqrt(h2)
    p["attn_w"] = jax.random.uniform(next(ks), (h2, h2), jnp.float32, -ba, ba)
    p["attn_b"] = jax.random.uniform(next(ks), (h2,), jnp.float32, -ba, ba)
    bc = 1.0 / math.sqrt(2 * h2)
    p["cat_w"] = jax.random.uniform(next(ks), (h2, 2 * h2), jnp.float32, -bc, bc)
    p["cat_b"] = jax.random.uniform(next(ks), (h2,), jnp.float32, -bc, bc)
    bo = 1.0 / math.sqrt(h2)
    p["out_w"] = jax.random.uniform(next(ks), (vocab, h2), jnp.float32, -bo, bo)
    p["out_b"] = jax.random.uniform(next(ks), (vocab,), jnp.float32, -bo, bo)
    return p


# ---------------------------------- main ------------------------------------ #

if __name__ == "__main__":
    # hardware-shaped small sizes: B=8 sublanes, 2H = vocab = 128 lanes
    T, B = 16, 8
    vocab, emb_dim, hid, n_layers = 128, 32, 64, 1

    key = jax.random.PRNGKey(0)
    kp, kt, kh, ke = jax.random.split(key, 4)
    params = init_params(kp, vocab, emb_dim, hid, n_layers)

    tokens = jax.random.randint(kt, (B,), 0, vocab, dtype=jnp.int32)
    last_hidden = 0.5 * jax.random.normal(kh, (2 * n_layers, B, hid), jnp.float32)
    encoder_outputs = 0.5 * jax.random.normal(ke, (T, B, 2 * hid), jnp.float32)

    logp, hid_out, attn_w = attn_decoder_pallas(params, tokens, last_hidden,
                                                encoder_outputs, n_layers, hid)
    jax.block_until_ready((logp, hid_out, attn_w))

    logp_r, hid_r, attn_r = attn_decoder_ref(params, tokens, last_hidden,
                                             encoder_outputs, n_layers, hid)
    assert logp.shape == (B, vocab)
    assert hid_out.shape == (2 * n_layers, B, hid)
    assert attn_w.shape == (B, 1, T)
    err = max(float(jnp.max(jnp.abs(logp - logp_r))),
              float(jnp.max(jnp.abs(hid_out - hid_r))),
              float(jnp.max(jnp.abs(attn_w - attn_r))))
    # bf16 MXU operands + approx reciprocal vs. a HIGHEST-precision f32 reference:
    # relaxed (but still tight) numeric tolerance.
    assert err < 3e-2, err

    print("KERNEL_OK")
</pallas_src>

<mosaic_0001>
module attributes {stable_mosaic.version = 11 : i64} {
  func.func @kernel(%arg0: memref<8x32xbf16, #tpu.memory_space<vmem>>, %arg1: memref<1x8x128xf32, #tpu.memory_space<vmem>>, %arg2: memref<8x16x128xf32, #tpu.memory_space<vmem>>, %arg3: memref<32x384xbf16, #tpu.memory_space<vmem>>, %arg4: memref<128x384xbf16, #tpu.memory_space<vmem>>, %arg5: memref<1x256xf32, #tpu.memory_space<vmem>>, %arg6: memref<1x128xf32, #tpu.memory_space<vmem>>, %arg7: memref<1x128xf32, #tpu.memory_space<vmem>>, %arg8: memref<128x256xbf16, #tpu.memory_space<vmem>>, %arg9: memref<1x128xf32, #tpu.memory_space<vmem>>, %arg10: memref<128x128xbf16, #tpu.memory_space<vmem>>, %arg11: memref<1x128xf32, #tpu.memory_space<vmem>>, %arg12: memref<128x128xbf16, #tpu.memory_space<vmem>>, %arg13: memref<1x128xf32, #tpu.memory_space<vmem>>, %arg14: memref<8x128xf32, #tpu.memory_space<vmem>>, %arg15: memref<1x8x128xf32, #tpu.memory_space<vmem>>, %arg16: memref<8x16xf32, #tpu.memory_space<vmem>>) attributes {dimension_semantics = [], scalar_prefetch = 0 : i64, scratch_operands = 0 : i64, tpu.core_type = #tpu.core_type<tc>} {
    %c0 = arith.constant 0 : index
    %c0_0 = arith.constant 0 : index
    %0 = vector.load %arg0[%c0, %c0_0] : memref<8x32xbf16, #tpu.memory_space<vmem>>, vector<8x32xbf16>
    %c0_1 = arith.constant 0 : index
    %c0_2 = arith.constant 0 : index
    %c0_3 = arith.constant 0 : index
    %1 = vector.load %arg1[%c0_1, %c0_2, %c0_3] : memref<1x8x128xf32, #tpu.memory_space<vmem>>, vector<1x8x128xf32>
    %2 = vector.shape_cast %1 : vector<1x8x128xf32> to vector<8x128xf32>
    %c0_4 = arith.constant 0 : index
    %c0_5 = arith.constant 0 : index
    %3 = vector.load %arg3[%c0_4, %c0_5] : memref<32x384xbf16, #tpu.memory_space<vmem>>, vector<32x384xbf16>
    %cst = arith.constant dense<0.000000e+00> : vector<8x384xf32>
    %4 = tpu.matmul %0, %3, %cst {dimension_numbers = #tpu.dot_dimension_numbers<[1], [0], [0], [1], [0, 0, 1, 1], [], []>} : vector<8x32xbf16>, vector<32x384xbf16>, vector<8x384xf32> -> vector<8x384xf32>
    %5 = arith.truncf %2 : vector<8x128xf32> to vector<8x128xbf16>
    %c0_6 = arith.constant 0 : index
    %c0_7 = arith.constant 0 : index
    %6 = vector.load %arg4[%c0_6, %c0_7] : memref<128x384xbf16, #tpu.memory_space<vmem>>, vector<128x384xbf16>
    %cst_8 = arith.constant dense<0.000000e+00> : vector<8x384xf32>
    %7 = tpu.matmul %5, %6, %cst_8 {dimension_numbers = #tpu.dot_dimension_numbers<[1], [0], [0], [1], [0, 0, 1, 1], [], []>} : vector<8x128xbf16>, vector<128x384xbf16>, vector<8x384xf32> -> vector<8x384xf32>
    %8 = vector.extract_strided_slice %4 {offsets = [0, 0], sizes = [8, 256], strides = [1, 1]} : vector<8x384xf32> to vector<8x256xf32>
    %9 = vector.extract_strided_slice %7 {offsets = [0, 0], sizes = [8, 256], strides = [1, 1]} : vector<8x384xf32> to vector<8x256xf32>
    %10 = arith.addf %8, %9 : vector<8x256xf32>
    %c0_9 = arith.constant 0 : index
    %c0_10 = arith.constant 0 : index
    %11 = vector.load %arg5[%c0_9, %c0_10] : memref<1x256xf32, #tpu.memory_space<vmem>>, vector<1x256xf32>
    %12 = vector.broadcast %11 : vector<1x256xf32> to vector<8x256xf32>
    %13 = arith.addf %10, %12 : vector<8x256xf32>
    %14 = arith.negf %13 : vector<8x256xf32>
    %15 = math.exp %14 : vector<8x256xf32>
    %cst_11 = arith.constant 1.000000e+00 : f32
    %16 = vector.broadcast %cst_11 : f32 to vector<8x256xf32>
    %17 = arith.addf %16, %15 : vector<8x256xf32>
    %18 = arith.divf %16, %17 : vector<8x256xf32>
    %19 = vector.extract_strided_slice %18 {offsets = [0, 0], sizes = [8, 128], strides = [1, 1]} : vector<8x256xf32> to vector<8x128xf32>
    %20 = vector.extract_strided_slice %18 {offsets = [0, 128], sizes = [8, 128], strides = [1, 1]} : vector<8x256xf32> to vector<8x128xf32>
    %21 = vector.extract_strided_slice %4 {offsets = [0, 256], sizes = [8, 128], strides = [1, 1]} : vector<8x384xf32> to vector<8x128xf32>
    %c0_12 = arith.constant 0 : index
    %c0_13 = arith.constant 0 : index
    %22 = vector.load %arg6[%c0_12, %c0_13] : memref<1x128xf32, #tpu.memory_space<vmem>>, vector<1x128xf32>
    %23 = vector.broadcast %22 : vector<1x128xf32> to vector<8x128xf32>
    %24 = arith.addf %21, %23 : vector<8x128xf32>
    %25 = vector.extract_strided_slice %7 {offsets = [0, 256], sizes = [8, 128], strides = [1, 1]} : vector<8x384xf32> to vector<8x128xf32>
    %c0_14 = arith.constant 0 : index
    %c0_15 = arith.constant 0 : index
    %26 = vector.load %arg7[%c0_14, %c0_15] : memref<1x128xf32, #tpu.memory_space<vmem>>, vector<1x128xf32>
    %27 = vector.broadcast %26 : vector<1x128xf32> to vector<8x128xf32>
    %28 = arith.addf %25, %27 : vector<8x128xf32>
    %29 = arith.mulf %19, %28 : vector<8x128xf32>
    %30 = arith.addf %24, %29 : vector<8x128xf32>
    %31 = math.tanh %30 : vector<8x128xf32>
    %cst_16 = arith.constant 1.000000e+00 : f32
    %32 = vector.broadcast %cst_16 : f32 to vector<8x128xf32>
    %33 = arith.subf %32, %20 : vector<8x128xf32>
    %34 = arith.mulf %33, %31 : vector<8x128xf32>
    %35 = arith.mulf %20, %2 : vector<8x128xf32>
    %36 = arith.addf %34, %35 : vector<8x128xf32>
    %c0_17 = arith.constant 0 : index
    %c0_18 = arith.constant 0 : index
    %c0_19 = arith.constant 0 : index
    %37 = vector.load %arg15[%c0_17, %c0_18, %c0_19] : memref<1x8x128xf32, #tpu.memory_space<vmem>>, vector<1x8x128xf32>
    %38 = vector.shape_cast %37 : vector<1x8x128xf32> to vector<8x128xf32>
    %39 = vector.shape_cast %36 : vector<8x128xf32> to vector<1x8x128xf32>
    tpu.vector_store %arg15[%c0_17, %c0_18, %c0_19], %39 {strides = array<i32>} : memref<1x8x128xf32, #tpu.memory_space<vmem>>, vector<1x8x128xf32>,
    %40 = arith.truncf %36 : vector<8x128xf32> to vector<8x128xbf16>
    %c0_20 = arith.constant 0 : index
    %c0_21 = arith.constant 0 : index
    %41 = vector.load %arg8[%c0_20, %c0_21] : memref<128x256xbf16, #tpu.memory_space<vmem>>, vector<128x256xbf16>
    %cst_22 = arith.constant dense<0.000000e+00> : vector<8x256xf32>
    %42 = tpu.matmul %40, %41, %cst_22 {dimension_numbers = #tpu.dot_dimension_numbers<[1], [0], [0], [1], [0, 0, 1, 1], [], []>} : vector<8x128xbf16>, vector<128x256xbf16>, vector<8x256xf32> -> vector<8x256xf32>
    %43 = vector.extract_strided_slice %42 {offsets = [0, 0], sizes = [8, 128], strides = [1, 1]} : vector<8x256xf32> to vector<8x128xf32>
    %44 = vector.extract_strided_slice %42 {offsets = [0, 128], sizes = [8, 128], strides = [1, 1]} : vector<8x256xf32> to vector<8x128xf32>
    %c0_23 = arith.constant 0 : index
    %c0_24 = arith.constant 0 : index
    %45 = vector.load %arg9[%c0_23, %c0_24] : memref<1x128xf32, #tpu.memory_space<vmem>>, vector<1x128xf32>
    %46 = vector.broadcast %45 : vector<1x128xf32> to vector<8x128xf32>
    %47 = arith.mulf %36, %46 : vector<8x128xf32>
    %cst_25 = arith.constant dense<0.000000e+00> : vector<8xf32>
    %48 = vector.multi_reduction <add>, %47, %cst_25 [1] : vector<8x128xf32> to vector<8xf32>
    %49 = vector.shape_cast %48 : vector<8xf32> to vector<8x1xf32>
    %c0_26 = arith.constant 0 : index
    %c0_27 = arith.constant 0 : index
    %c0_28 = arith.constant 0 : index
    %50 = vector.load %arg2[%c0_26, %c0_27, %c0_28] : memref<8x16x128xf32, #tpu.memory_space<vmem>>, vector<8x16x128xf32>
    %51 = vector.shape_cast %43 : vector<8x128xf32> to vector<8x1x128xf32>
    %52 = vector.broadcast %51 : vector<8x1x128xf32> to vector<8x16x128xf32>
    %53 = arith.mulf %50, %52 : vector<8x16x128xf32>
    %cst_29 = arith.constant dense<0.000000e+00> : vector<8x16xf32>
    %54 = vector.multi_reduction <add>, %53, %cst_29 [2] : vector<8x16x128xf32> to vector<8x16xf32>
    %55 = vector.broadcast %49 : vector<8x1xf32> to vector<8x16xf32>
    %56 = arith.addf %54, %55 : vector<8x16xf32>
    %cst_30 = arith.constant dense<0xFF800000> : vector<8xf32>
    %57 = vector.multi_reduction <maximumf>, %56, %cst_30 [1] : vector<8x16xf32> to vector<8xf32>
    %58 = vector.shape_cast %57 : vector<8xf32> to vector<8x1xf32>
    %59 = vector.broadcast %58 : vector<8x1xf32> to vector<8x16xf32>
    %60 = arith.subf %56, %59 : vector<8x16xf32>
    %61 = math.exp %60 : vector<8x16xf32>
    %cst_31 = arith.constant dense<0.000000e+00> : vector<8xf32>
    %62 = vector.multi_reduction <add>, %61, %cst_31 [1] : vector<8x16xf32> to vector<8xf32>
    %63 = vector.shape_cast %62 : vector<8xf32> to vector<8x1xf32>
    %64 = tpu.reciprocal %63 {approx = true} : vector<8x1xf32> -> vector<8x1xf32>
    %65 = vector.broadcast %64 : vector<8x1xf32> to vector<8x16xf32>
    %66 = arith.mulf %61, %65 : vector<8x16xf32>
    %c0_32 = arith.constant 0 : index
    %c0_33 = arith.constant 0 : index
    %67 = vector.load %arg16[%c0_32, %c0_33] : memref<8x16xf32, #tpu.memory_space<vmem>>, vector<8x16xf32>
    tpu.vector_store %arg16[%c0_32, %c0_33], %66 {strides = array<i32>} : memref<8x16xf32, #tpu.memory_space<vmem>>, vector<8x16xf32>,
    %68 = vector.shape_cast %66 : vector<8x16xf32> to vector<8x16x1xf32>
    %69 = vector.broadcast %68 : vector<8x16x1xf32> to vector<8x16x128xf32>
    %70 = arith.mulf %69, %50 : vector<8x16x128xf32>
    %cst_34 = arith.constant dense<0.000000e+00> : vector<8x128xf32>
    %71 = vector.multi_reduction <add>, %70, %cst_34 [1] : vector<8x16x128xf32> to vector<8x128xf32>
    %72 = arith.truncf %71 : vector<8x128xf32> to vector<8x128xbf16>
    %c0_35 = arith.constant 0 : index
    %c0_36 = arith.constant 0 : index
    %73 = vector.load %arg10[%c0_35, %c0_36] : memref<128x128xbf16, #tpu.memory_space<vmem>>, vector<128x128xbf16>
    %cst_37 = arith.constant dense<0.000000e+00> : vector<8x128xf32>
    %74 = tpu.matmul %72, %73, %cst_37 {dimension_numbers = #tpu.dot_dimension_numbers<[1], [0], [0], [1], [0, 0, 1, 1], [], []>} : vector<8x128xbf16>, vector<128x128xbf16>, vector<8x128xf32> -> vector<8x128xf32>
    %75 = arith.addf %44, %74 : vector<8x128xf32>
    %c0_38 = arith.constant 0 : index
    %c0_39 = arith.constant 0 : index
    %76 = vector.load %arg11[%c0_38, %c0_39] : memref<1x128xf32, #tpu.memory_space<vmem>>, vector<1x128xf32>
    %77 = vector.broadcast %76 : vector<1x128xf32> to vector<8x128xf32>
    %78 = arith.addf %75, %77 : vector<8x128xf32>
    %79 = math.tanh %78 : vector<8x128xf32>
    %80 = arith.truncf %79 : vector<8x128xf32> to vector<8x128xbf16>
    %c0_40 = arith.constant 0 : index
    %c0_41 = arith.constant 0 : index
    %81 = vector.load %arg12[%c0_40, %c0_41] : memref<128x128xbf16, #tpu.memory_space<vmem>>, vector<128x128xbf16>
    %cst_42 = arith.constant dense<0.000000e+00> : vector<8x128xf32>
    %82 = tpu.matmul %80, %81, %cst_42 {dimension_numbers = #tpu.dot_dimension_numbers<[1], [0], [0], [1], [0, 0, 1, 1], [], []>} : vector<8x128xbf16>, vector<128x128xbf16>, vector<8x128xf32> -> vector<8x128xf32>
    %c0_43 = arith.constant 0 : index
    %c0_44 = arith.constant 0 : index
    %83 = vector.load %arg13[%c0_43, %c0_44] : memref<1x128xf32, #tpu.memory_space<vmem>>, vector<1x128xf32>
    %84 = vector.broadcast %83 : vector<1x128xf32> to vector<8x128xf32>
    %85 = arith.addf %82, %84 : vector<8x128xf32>
    %cst_45 = arith.constant dense<0xFF800000> : vector<8xf32>
    %86 = vector.multi_reduction <maximumf>, %85, %cst_45 [1] : vector<8x128xf32> to vector<8xf32>
    %87 = vector.shape_cast %86 : vector<8xf32> to vector<8x1xf32>
    %88 = vector.broadcast %87 : vector<8x1xf32> to vector<8x128xf32>
    %89 = arith.subf %85, %88 : vector<8x128xf32>
    %90 = math.exp %89 : vector<8x128xf32>
    %cst_46 = arith.constant dense<0.000000e+00> : vector<8xf32>
    %91 = vector.multi_reduction <add>, %90, %cst_46 [1] : vector<8x128xf32> to vector<8xf32>
    %92 = vector.shape_cast %91 : vector<8xf32> to vector<8x1xf32>
    %93 = math.log %92 : vector<8x1xf32>
    %94 = vector.broadcast %93 : vector<8x1xf32> to vector<8x128xf32>
    %95 = arith.subf %89, %94 : vector<8x128xf32>
    %c0_47 = arith.constant 0 : index
    %c0_48 = arith.constant 0 : index
    %96 = vector.load %arg14[%c0_47, %c0_48] : memref<8x128xf32, #tpu.memory_space<vmem>>, vector<8x128xf32>
    tpu.vector_store %arg14[%c0_47, %c0_48], %95 {strides = array<i32>} : memref<8x128xf32, #tpu.memory_space<vmem>>, vector<8x128xf32>,
    return
  }
}

</mosaic_0001>

<llo_original>
// kernel: tpu_custom_call.1
$region0: #{tpu_custom_call.1}
  #allocation0 [shape = 'u32[]', space=smem, size = 0x4, offset = 0x4, fixed_abs, tag = 'smem constant byte address 0x4 - core index']
  #allocation1 [shape = 'u32[144,128]{1,0:T(1,128)}', space=vmem, size = 0x12000, scoped, tag = 'internal scratch']
  %s0 = inlined_call_operand.hbm [shape: bf16[8,32], index: 0, kind: input, shape index: {}]
  %s1 = inlined_call_operand.hbm [shape: f32[1,8,128], index: 1, kind: input, shape index: {}]
  %s2 = inlined_call_operand.hbm [shape: f32[8,16,128], index: 2, kind: input, shape index: {}]
  %s3 = inlined_call_operand.hbm [shape: bf16[32,384], index: 3, kind: input, shape index: {}]
  %s4 = inlined_call_operand.hbm [shape: bf16[128,384], index: 4, kind: input, shape index: {}]
  %s5 = inlined_call_operand.vmem [shape: f32[1,256], index: 5, kind: input, shape index: {}]
  %s6 = inlined_call_operand.vmem [shape: f32[1,128], index: 6, kind: input, shape index: {}]
  %s7 = inlined_call_operand.vmem [shape: f32[1,128], index: 7, kind: input, shape index: {}]
  %s8 = inlined_call_operand.hbm [shape: bf16[128,256], index: 8, kind: input, shape index: {}]
  %s9 = inlined_call_operand.vmem [shape: f32[1,128], index: 9, kind: input, shape index: {}]
  %s10 = inlined_call_operand.hbm [shape: bf16[128,128], index: 10, kind: input, shape index: {}]
  %s11 = inlined_call_operand.vmem [shape: f32[1,128], index: 11, kind: input, shape index: {}]
  %s12 = inlined_call_operand.hbm [shape: bf16[128,128], index: 12, kind: input, shape index: {}]
  %s13 = inlined_call_operand.vmem [shape: f32[1,128], index: 13, kind: input, shape index: {}]
  %s14 = inlined_call_operand.hbm [shape: f32[8,128], index: 14, kind: output, shape index: {0}]
  %s15 = inlined_call_operand.hbm [shape: f32[1,8,128], index: 15, kind: output, shape index: {1}]
  %s16 = inlined_call_operand.hbm [shape: f32[8,16], index: 16, kind: output, shape index: {2}]
  %17 = xla_tuple %s14, %s15, %s16
  %s18 = sld [smem:[#allocation0]]
  $region114: #{tpu_custom_call.1} parent=0
    _
  %s20 = ssub.s32 1, %s18
  %s21 = scalar_select 0, %s20, %s18
  $region1: #{tpu_custom_call.1} parent=0
    #allocation2 [shape = 'u8[2048]{0}', space=vmem, size = 0x800, scoped, tag = 'input window, operand 0, single buffered']
    #allocation3 [shape = 's32[1]{0}', space=sflag, size = 0x4, scoped, tag = 'scoped memory for tpu_custom_call.1']
    #allocation4 [shape = 's32[1]{0}', space=sflag, size = 0x4, scoped, tag = 'scoped memory for tpu_custom_call.1']
    #allocation5 [shape = 'u8[4096]{0}', space=vmem, size = 0x1000, scoped, tag = 'input window, operand 1, single buffered']
    #allocation6 [shape = 's32[1]{0}', space=sflag, size = 0x4, scoped, tag = 'scoped memory for tpu_custom_call.1']
    #allocation7 [shape = 'u8[65536]{0}', space=vmem, size = 0x10000, scoped, tag = 'input window, operand 2, single buffered']
    #allocation8 [shape = 'u8[24576]{0}', space=vmem, size = 0x6000, scoped, tag = 'input window, operand 3, single buffered']
    #allocation9 [shape = 's32[1]{0}', space=sflag, size = 0x4, scoped, tag = 'scoped memory for tpu_custom_call.1']
    #allocation10 [shape = 'u8[98304]{0}', space=vmem, size = 0x18000, scoped, tag = 'input window, operand 4, single buffered']
    #allocation11 [shape = 'u8[65536]{0}', space=vmem, size = 0x10000, scoped, tag = 'input window, operand 8, single buffered']
    #allocation12 [shape = 's32[1]{0}', space=sflag, size = 0x4, scoped, tag = 'scoped memory for tpu_custom_call.1']
    #allocation13 [shape = 'u8[32768]{0}', space=vmem, size = 0x8000, scoped, tag = 'input window, operand 10, single buffered']
    #allocation14 [shape = 'u8[32768]{0}', space=vmem, size = 0x8000, scoped, tag = 'input window, operand 12, single buffered']
    #allocation15 [shape = 's32[1]{0}', space=sflag, size = 0x4, scoped, tag = 'scoped memory for tpu_custom_call.1']
    #allocation16 [shape = 'u8[4096]{0}', space=vmem, size = 0x1000, scoped, tag = 'output window, operand 0, single buffered']
    #allocation17 [shape = 'u8[4096]{0}', space=vmem, size = 0x1000, scoped, tag = 'output window, operand 1, single buffered']
    #allocation18 [shape = 's32[1]{0}', space=sflag, size = 0x4, scoped, tag = 'scoped memory for tpu_custom_call.1']
    #allocation19 [shape = 'u8[4096]{0}', space=vmem, size = 0x1000, scoped, tag = 'output window, operand 2, single buffered']
    %22 = vsyncpa [#allocation3], 0
    %23 = vsyncpa [#allocation6], 0
    %24 = vsyncpa [#allocation9], 0
    %25 = vsyncpa [#allocation12], 0
    %26 = vsyncpa [#allocation15], 0
    %27 = vsyncpa [#allocation4], 0
    %28 = vsyncpa [#allocation18], 0
    // Predicated region
    $region2: #{tpu_custom_call.1} parent=1 // pred_check
      _
    $region3: #{tpu_custom_call.1} parent=1 // pred_check_branch
      %30 = sbr.rel (0) target = $region5
    $region4: #{tpu_custom_call.1} parent=1 // pred_region
      %s32 = ssub.s32 64, 64
      %33 = vsyncadd [#allocation3], %s32
      %s35 = sshll.u32 [#allocation2], 4
      %s36 = int_to_ptr.vmem [resolvable:$true] %s35
      %38 = dma.hbm_to_vmem [thread:$0]  %s0, 64, %s36, [#allocation3]
    $region5: #{tpu_custom_call.1} parent=1 // pred_fallthru
      _
    // Predicated region
    $region6: #{tpu_custom_call.1} parent=1 // pred_check
      _
    $region7: #{tpu_custom_call.1} parent=1 // pred_check_branch
      %40 = sbr.rel (0) target = $region9
    $region8: #{tpu_custom_call.1} parent=1 // pred_region
      %s42 = ssub.s32 128, 128
      %43 = vsyncadd [#allocation6], %s42
      %s45 = sshll.u32 [#allocation5], 4
      %s46 = int_to_ptr.vmem [resolvable:$true] %s45
      %48 = dma.hbm_to_vmem [thread:$0]  %s1, 128, %s46, [#allocation6]
    $region9: #{tpu_custom_call.1} parent=1 // pred_fallthru
      _
    // Predicated region
    $region10: #{tpu_custom_call.1} parent=1 // pred_check
      _
    $region11: #{tpu_custom_call.1} parent=1 // pred_check_branch
      %50 = sbr.rel (0) target = $region13
    $region12: #{tpu_custom_call.1} parent=1 // pred_region
      %s52 = ssub.s32 2048, 2048
      %53 = vsyncadd [#allocation6], %s52
      %s54 = sshll.u32 [#allocation7], 4
      %s55 = int_to_ptr.vmem [resolvable:$true] %s54
      %60 = dma.hbm_to_vmem [thread:$0]  %s2, 2048, %s55, [#allocation6], 128, 128, 8
    $region13: #{tpu_custom_call.1} parent=1 // pred_fallthru
      _
    // Predicated region
    $region14: #{tpu_custom_call.1} parent=1 // pred_check
      _
    $region15: #{tpu_custom_call.1} parent=1 // pred_check_branch
      %62 = sbr.rel (0) target = $region17
    $region16: #{tpu_custom_call.1} parent=1 // pred_region
      %s64 = ssub.s32 768, 768
      %65 = vsyncadd [#allocation9], %s64
      %s66 = sshll.u32 [#allocation8], 4
      %s67 = int_to_ptr.vmem [resolvable:$true] %s66
      %72 = dma.hbm_to_vmem [thread:$0]  %s3, 768, %s67, [#allocation9], 192, 192, 12
    $region17: #{tpu_custom_call.1} parent=1 // pred_fallthru
      _
    // Predicated region
    $region18: #{tpu_custom_call.1} parent=1 // pred_check
      _
    $region19: #{tpu_custom_call.1} parent=1 // pred_check_branch
      %74 = sbr.rel (0) target = $region21
    $region20: #{tpu_custom_call.1} parent=1 // pred_region
      %s76 = ssub.s32 3072, 3072
      %77 = vsyncadd [#allocation9], %s76
      %s78 = sshll.u32 [#allocation10], 4
      %s79 = int_to_ptr.vmem [resolvable:$true] %s78
      %84 = dma.hbm_to_vmem [thread:$0]  %s4, 3072, %s79, [#allocation9], 192, 192, 12
    $region21: #{tpu_custom_call.1} parent=1 // pred_fallthru
      _
    // Predicated region
    $region22: #{tpu_custom_call.1} parent=1 // pred_check
      _
    $region23: #{tpu_custom_call.1} parent=1 // pred_check_branch
      %86 = sbr.rel (0) target = $region25
    $region24: #{tpu_custom_call.1} parent=1 // pred_region
      _
    $region25: #{tpu_custom_call.1} parent=1 // pred_fallthru
      _
    // Predicated region
    $region26: #{tpu_custom_call.1} parent=1 // pred_check
      _
    $region27: #{tpu_custom_call.1} parent=1 // pred_check_branch
      %88 = sbr.rel (0) target = $region29
    $region28: #{tpu_custom_call.1} parent=1 // pred_region
      _
    $region29: #{tpu_custom_call.1} parent=1 // pred_fallthru
      _
    // Predicated region
    $region30: #{tpu_custom_call.1} parent=1 // pred_check
      _
    $region31: #{tpu_custom_call.1} parent=1 // pred_check_branch
      %90 = sbr.rel (0) target = $region33
    $region32: #{tpu_custom_call.1} parent=1 // pred_region
      _
    $region33: #{tpu_custom_call.1} parent=1 // pred_fallthru
      _
    // Predicated region
    $region34: #{tpu_custom_call.1} parent=1 // pred_check
      _
    $region35: #{tpu_custom_call.1} parent=1 // pred_check_branch
      %92 = sbr.rel (0) target = $region37
    $region36: #{tpu_custom_call.1} parent=1 // pred_region
      %s94 = ssub.s32 2048, 2048
      %95 = vsyncadd [#allocation12], %s94
      %s96 = sshll.u32 [#allocation11], 4
      %s97 = int_to_ptr.vmem [resolvable:$true] %s96
      %102 = dma.hbm_to_vmem [thread:$0]  %s8, 2048, %s97, [#allocation12], 128, 128, 8
    $region37: #{tpu_custom_call.1} parent=1 // pred_fallthru
      _
    // Predicated region
    $region38: #{tpu_custom_call.1} parent=1 // pred_check
      _
    $region39: #{tpu_custom_call.1} parent=1 // pred_check_branch
      %104 = sbr.rel (0) target = $region41
    $region40: #{tpu_custom_call.1} parent=1 // pred_region
      _
    $region41: #{tpu_custom_call.1} parent=1 // pred_fallthru
      _
    // Predicated region
    $region42: #{tpu_custom_call.1} parent=1 // pred_check
      _
    $region43: #{tpu_custom_call.1} parent=1 // pred_check_branch
      %106 = sbr.rel (0) target = $region45
    $region44: #{tpu_custom_call.1} parent=1 // pred_region
      %s108 = ssub.s32 1024, 1024
      %109 = vsyncadd [#allocation12], %s108
      %s110 = sshll.u32 [#allocation13], 4
      %s111 = int_to_ptr.vmem [resolvable:$true] %s110
      %116 = dma.hbm_to_vmem [thread:$0]  %s10, 1024, %s111, [#allocation12], 64, 64, 4
    $region45: #{tpu_custom_call.1} parent=1 // pred_fallthru
      _
    // Predicated region
    $region46: #{tpu_custom_call.1} parent=1 // pred_check
      _
    $region47: #{tpu_custom_call.1} parent=1 // pred_check_branch
      %118 = sbr.rel (0) target = $region49
    $region48: #{tpu_custom_call.1} parent=1 // pred_region
      _
    $region49: #{tpu_custom_call.1} parent=1 // pred_fallthru
      _
    // Predicated region
    $region50: #{tpu_custom_call.1} parent=1 // pred_check
      _
    $region51: #{tpu_custom_call.1} parent=1 // pred_check_branch
      %120 = sbr.rel (0) target = $region53
    $region52: #{tpu_custom_call.1} parent=1 // pred_region
      %s122 = ssub.s32 1024, 1024
      %123 = vsyncadd [#allocation15], %s122
      %s124 = sshll.u32 [#allocation14], 4
      %s125 = int_to_ptr.vmem [resolvable:$true] %s124
      %130 = dma.hbm_to_vmem [thread:$0]  %s12, 1024, %s125, [#allocation15], 64, 64, 4
    $region53: #{tpu_custom_call.1} parent=1 // pred_fallthru
      _
    // Predicated region
    $region54: #{tpu_custom_call.1} parent=1 // pred_check
      _
    $region55: #{tpu_custom_call.1} parent=1 // pred_check_branch
      %132 = sbr.rel (0) target = $region57
    $region56: #{tpu_custom_call.1} parent=1 // pred_region
      _
    $region57: #{tpu_custom_call.1} parent=1 // pred_fallthru
      _
    // Predicated region
    $region58: #{tpu_custom_call.1} parent=1 // pred_check
      _
    $region59: #{tpu_custom_call.1} parent=1 // pred_check_branch
      %134 = sbr.rel (0) target = $region61
    $region60: #{tpu_custom_call.1} parent=1 // pred_region
      %135 = dma.done [#allocation3], 64
    $region61: #{tpu_custom_call.1} parent=1 // pred_fallthru
      _
    // Predicated region
    $region62: #{tpu_custom_call.1} parent=1 // pred_check
      _
    $region63: #{tpu_custom_call.1} parent=1 // pred_check_branch
      %137 = sbr.rel (0) target = $region65
    $region64: #{tpu_custom_call.1} parent=1 // pred_region
      %138 = dma.done [#allocation6], 128
    $region65: #{tpu_custom_call.1} parent=1 // pred_fallthru
      _
    // Predicated region
    $region66: #{tpu_custom_call.1} parent=1 // pred_check
      _
    $region67: #{tpu_custom_call.1} parent=1 // pred_check_branch
      %140 = sbr.rel (0) target = $region69
    $region68: #{tpu_custom_call.1} parent=1 // pred_region
      %141 = dma.done [#allocation6], 2048
    $region69: #{tpu_custom_call.1} parent=1 // pred_fallthru
      _
    // Predicated region
    $region70: #{tpu_custom_call.1} parent=1 // pred_check
      _
    $region71: #{tpu_custom_call.1} parent=1 // pred_check_branch
      %143 = sbr.rel (0) target = $region73
    $region72: #{tpu_custom_call.1} parent=1 // pred_region
      %144 = dma.done [#allocation9], 768
    $region73: #{tpu_custom_call.1} parent=1 // pred_fallthru
      _
    // Predicated region
    $region74: #{tpu_custom_call.1} parent=1 // pred_check
      _
    $region75: #{tpu_custom_call.1} parent=1 // pred_check_branch
      %146 = sbr.rel (0) target = $region77
    $region76: #{tpu_custom_call.1} parent=1 // pred_region
      %147 = dma.done [#allocation9], 3072
    $region77: #{tpu_custom_call.1} parent=1 // pred_fallthru
      _
    // Predicated region
    $region78: #{tpu_custom_call.1} parent=1 // pred_check
      _
    $region79: #{tpu_custom_call.1} parent=1 // pred_check_branch
      %149 = sbr.rel (0) target = $region81
    $region80: #{tpu_custom_call.1} parent=1 // pred_region
      %150 = dma.done [#allocation12], 2048
    $region81: #{tpu_custom_call.1} parent=1 // pred_fallthru
      _
    // Predicated region
    $region82: #{tpu_custom_call.1} parent=1 // pred_check
      _
    $region83: #{tpu_custom_call.1} parent=1 // pred_check_branch
      %152 = sbr.rel (0) target = $region85
    $region84: #{tpu_custom_call.1} parent=1 // pred_region
      %153 = dma.done [#allocation12], 1024
    $region85: #{tpu_custom_call.1} parent=1 // pred_fallthru
      _
    // Predicated region
    $region86: #{tpu_custom_call.1} parent=1 // pred_check
      _
    $region87: #{tpu_custom_call.1} parent=1 // pred_check_branch
      %155 = sbr.rel (0) target = $region89
    $region88: #{tpu_custom_call.1} parent=1 // pred_region
      %156 = dma.done [#allocation15], 1024
    $region89: #{tpu_custom_call.1} parent=1 // pred_fallthru
      _
    %v158 = vld [vmem:[#allocation2] sm:$0xf]
    %v159 = vld [vmem:[#allocation5] sm:$0xff]
    %v160 = vld [vmem:[#allocation8] sm:$0xff]
    %v161 = vld [vmem:[#allocation8 + $0x8] sm:$0xf]
    %v162 = vld [vmem:[#allocation8 + $0xc] sm:$0xff]
    %v163 = vld [vmem:[#allocation8 + $0x14] sm:$0xf]
    %v164 = vld [vmem:[#allocation8 + $0x18] sm:$0xff]
    %v165 = vld [vmem:[#allocation8 + $0x20] sm:$0xf]
    %v166 = vld [vmem:[#allocation8 + $0x24] sm:$0xff]
    %v167 = vld [vmem:[#allocation8 + $0x2c] sm:$0xf]
    %v176 = vunpack.c.l.b16 %v160
    %v177 = vunpack.c.h.b16 %v160
    %v178 = vunpack.c.l.b16 %v161
    %v179 = vunpack.c.l.b16 %v162
    %v180 = vunpack.c.h.b16 %v162
    %v181 = vunpack.c.l.b16 %v163
    %v182 = vunpack.c.l.b16 %v164
    %v183 = vunpack.c.h.b16 %v164
    %v184 = vunpack.c.l.b16 %v165
    %v185 = vunpack.c.l.b16 %v166
    %v186 = vunpack.c.h.b16 %v166
    %v187 = vunpack.c.l.b16 %v167
    %v188 = vpack.c.b16 %v179, %v176
    %v189 = vpack.c.b16 %v180, %v177
    %v190 = vpack.c.b16 %v181, %v178
    %v191 = vpack.c.b16 %v185, %v182
    %v192 = vpack.c.b16 %v186, %v183
    %v193 = vpack.c.b16 %v187, %v184
    %vm200 = vcmask 261120
    %v202 = vsel %vm200, %v158, 0
    %204 = vmatprep.subr.bf16.mxu0 0
    %205 = vmatpush1.bf16.msra.mxu0 0
    %206 = vmatprep.subr.bf16.mxu0 0
    %207 = vmatpush1.bf16.msra.mxu0 0
    %208 = vmatprep.subr.bf16.mxu0 0
    %209 = vmatpush1.bf16.msra.mxu0 0
    %210 = vmatprep.subr.bf16.mxu0 0
    %211 = vmatpush1.bf16.msra.mxu0 0
    %212 = vmatprep.subr.bf16.mxu0 0
    %213 = vmatpush1.bf16.msra.mxu0 0
    %214 = vmatprep.subr.bf16.mxu0 0
    %215 = vmatpush1.bf16.msra.mxu0 0
    %216 = vmatprep.subr.bf16.mxu0 %v192
    %217 = vmatpush1.bf16.msra.mxu0 %v191
    %218 = vmatprep.subr.bf16.mxu0 %v189
    %219 = vmatpush1.bf16.msra.mxu0 %v188
    %220 = vmatprep.subr.bf16.mxu0 0
    %221 = vmatpush2.bf16.msra.mxu0 0
    %222 = vmatprep.subr.bf16.mxu0 0
    %223 = vmatpush2.bf16.msra.mxu0 0
    %224 = vmatprep.subr.bf16.mxu0 0
    %225 = vmatpush2.bf16.msra.mxu0 0
    %226 = vmatprep.subr.bf16.mxu0 0
    %227 = vmatpush2.bf16.msra.mxu0 0
    %228 = vmatprep.subr.bf16.mxu0 0
    %229 = vmatpush2.bf16.msra.mxu0 0
    %230 = vmatprep.subr.bf16.mxu0 0
    %231 = vmatpush2.bf16.msra.mxu0 0
    %232 = vmatprep.subr.bf16.mxu0 0
    %233 = vmatpush2.bf16.msra.mxu0 0
    %234 = vmatprep.subr.bf16.mxu0 0
    %235 = vmatpush2.bf16.msra.mxu0 0
    %236 = vmatprep.mubr.bf16.mxu0 0
    %237 = vmatmul.mubr.bf16.gmra.mxu0 %v202
    %v238 = vpop.f32.mrf.mxu0
    %v239 = vadd.f32 0.0, %v238
    %v240 = vpop.f32.mrf.mxu0
    %v241 = vadd.f32 0.0, %v240
    %v242 = vpop.f32.mrf.mxu0
    %v243 = vpop.f32.mrf.mxu0
    %244 = vdwg.mxu0
    %245 = vmatprep.subr.bf16.mxu0 0
    %246 = vmatpush1.bf16.msra.mxu0 0
    %247 = vmatprep.subr.bf16.mxu0 0
    %248 = vmatpush1.bf16.msra.mxu0 0
    %249 = vmatprep.subr.bf16.mxu0 0
    %250 = vmatpush1.bf16.msra.mxu0 0
    %251 = vmatprep.subr.bf16.mxu0 0
    %252 = vmatpush1.bf16.msra.mxu0 0
    %253 = vmatprep.subr.bf16.mxu0 0
    %254 = vmatpush1.bf16.msra.mxu0 0
    %255 = vmatprep.subr.bf16.mxu0 0
    %256 = vmatpush1.bf16.msra.mxu0 0
    %257 = vmatprep.subr.bf16.mxu0 0
    %258 = vmatpush1.bf16.msra.mxu0 %v193
    %259 = vmatprep.subr.bf16.mxu0 0
    %260 = vmatpush1.bf16.msra.mxu0 %v190
    %261 = vmatprep.subr.bf16.mxu0 0
    %262 = vmatpush2.bf16.msra.mxu0 0
    %263 = vmatprep.subr.bf16.mxu0 0
    %264 = vmatpush2.bf16.msra.mxu0 0
    %265 = vmatprep.subr.bf16.mxu0 0
    %266 = vmatpush2.bf16.msra.mxu0 0
    %267 = vmatprep.subr.bf16.mxu0 0
    %268 = vmatpush2.bf16.msra.mxu0 0
    %269 = vmatprep.subr.bf16.mxu0 0
    %270 = vmatpush2.bf16.msra.mxu0 0
    %271 = vmatprep.subr.bf16.mxu0 0
    %272 = vmatpush2.bf16.msra.mxu0 0
    %273 = vmatprep.subr.bf16.mxu0 0
    %274 = vmatpush2.bf16.msra.mxu0 0
    %275 = vmatprep.subr.bf16.mxu0 0
    %276 = vmatpush2.bf16.msra.mxu0 0
    %277 = vmatprep.mubr.bf16.mxu0 0
    %278 = vmatmul.mubr.bf16.gmra.mxu0 %v202
    %v279 = vpop.f32.mrf.mxu0
    %v280 = vadd.f32 0.0, %v279
    %v281 = vpop.f32.mrf.mxu0
    %v282 = vpop.f32.mrf.mxu0
    %v283 = vpop.f32.mrf.mxu0
    %284 = vdwg.mxu0
    %v285 = vpack.c.bf16 %v159, %v159
    %v286 = vld [vmem:[#allocation10] sm:$0xff]
    %v287 = vld [vmem:[#allocation10 + $0x8] sm:$0xf]
    %v288 = vld [vmem:[#allocation10 + $0xc] sm:$0xff]
    %v289 = vld [vmem:[#allocation10 + $0x14] sm:$0xf]
    %v290 = vld [vmem:[#allocation10 + $0x18] sm:$0xff]
    %v291 = vld [vmem:[#allocation10 + $0x20] sm:$0xf]
    %v292 = vld [vmem:[#allocation10 + $0x24] sm:$0xff]
    %v293 = vld [vmem:[#allocation10 + $0x2c] sm:$0xf]
    %v294 = vld [vmem:[#allocation10 + $0x30] sm:$0xff]
    %v295 = vld [vmem:[#allocation10 + $0x38] sm:$0xf]
    %v296 = vld [vmem:[#allocation10 + $0x3c] sm:$0xff]
    %v297 = vld [vmem:[#allocation10 + $0x44] sm:$0xf]
    %v298 = vld [vmem:[#allocation10 + $0x48] sm:$0xff]
    %v299 = vld [vmem:[#allocation10 + $0x50] sm:$0xf]
    %v300 = vld [vmem:[#allocation10 + $0x54] sm:$0xff]
    %v301 = vld [vmem:[#allocation10 + $0x5c] sm:$0xf]
    %v302 = vld [vmem:[#allocation10 + $0x60] sm:$0xff]
    %v303 = vld [vmem:[#allocation10 + $0x68] sm:$0xf]
    %v304 = vld [vmem:[#allocation10 + $0x6c] sm:$0xff]
    %v305 = vld [vmem:[#allocation10 + $0x74] sm:$0xf]
    %v306 = vld [vmem:[#allocation10 + $0x78] sm:$0xff]
    %v307 = vld [vmem:[#allocation10 + $0x80] sm:$0xf]
    %v308 = vld [vmem:[#allocation10 + $0x84] sm:$0xff]
    %v309 = vld [vmem:[#allocation10 + $0x8c] sm:$0xf]
    %v310 = vld [vmem:[#allocation10 + $0x90] sm:$0xff]
    %v311 = vld [vmem:[#allocation10 + $0x98] sm:$0xf]
    %v312 = vld [vmem:[#allocation10 + $0x9c] sm:$0xff]
    %v313 = vld [vmem:[#allocation10 + $0xa4] sm:$0xf]
    %v314 = vld [vmem:[#allocation10 + $0xa8] sm:$0xff]
    %v315 = vld [vmem:[#allocation10 + $0xb0] sm:$0xf]
    %v316 = vld [vmem:[#allocation10 + $0xb4] sm:$0xff]
    %v317 = vld [vmem:[#allocation10 + $0xbc] sm:$0xf]
    %v350 = vunpack.c.l.b16 %v286
    %v351 = vunpack.c.h.b16 %v286
    %v352 = vunpack.c.l.b16 %v287
    %v353 = vunpack.c.l.b16 %v288
    %v354 = vunpack.c.h.b16 %v288
    %v355 = vunpack.c.l.b16 %v289
    %v356 = vunpack.c.l.b16 %v290
    %v357 = vunpack.c.h.b16 %v290
    %v358 = vunpack.c.l.b16 %v291
    %v359 = vunpack.c.l.b16 %v292
    %v360 = vunpack.c.h.b16 %v292
    %v361 = vunpack.c.l.b16 %v293
    %v362 = vunpack.c.l.b16 %v294
    %v363 = vunpack.c.h.b16 %v294
    %v364 = vunpack.c.l.b16 %v295
    %v365 = vunpack.c.l.b16 %v296
    %v366 = vunpack.c.h.b16 %v296
    %v367 = vunpack.c.l.b16 %v297
    %v368 = vunpack.c.l.b16 %v298
    %v369 = vunpack.c.h.b16 %v298
    %v370 = vunpack.c.l.b16 %v299
    %v371 = vunpack.c.l.b16 %v300
    %v372 = vunpack.c.h.b16 %v300
    %v373 = vunpack.c.l.b16 %v301
    %v374 = vunpack.c.l.b16 %v302
    %v375 = vunpack.c.h.b16 %v302
    %v376 = vunpack.c.l.b16 %v303
    %v377 = vunpack.c.l.b16 %v304
    %v378 = vunpack.c.h.b16 %v304
    %v379 = vunpack.c.l.b16 %v305
    %v380 = vunpack.c.l.b16 %v306
    %v381 = vunpack.c.h.b16 %v306
    %v382 = vunpack.c.l.b16 %v307
    %v383 = vunpack.c.l.b16 %v308
    %v384 = vunpack.c.h.b16 %v308
    %v385 = vunpack.c.l.b16 %v309
    %v386 = vunpack.c.l.b16 %v310
    %v387 = vunpack.c.h.b16 %v310
    %v388 = vunpack.c.l.b16 %v311
    %v389 = vunpack.c.l.b16 %v312
    %v390 = vunpack.c.h.b16 %v312
    %v391 = vunpack.c.l.b16 %v313
    %v392 = vunpack.c.l.b16 %v314
    %v393 = vunpack.c.h.b16 %v314
    %v394 = vunpack.c.l.b16 %v315
    %v395 = vunpack.c.l.b16 %v316
    %v396 = vunpack.c.h.b16 %v316
    %v397 = vunpack.c.l.b16 %v317
    %v398 = vpack.c.b16 %v353, %v350
    %v399 = vpack.c.b16 %v354, %v351
    %v400 = vpack.c.b16 %v355, %v352
    %v401 = vpack.c.b16 %v359, %v356
    %v402 = vpack.c.b16 %v360, %v357
    %v403 = vpack.c.b16 %v361, %v358
    %v404 = vpack.c.b16 %v365, %v362
    %v405 = vpack.c.b16 %v366, %v363
    %v406 = vpack.c.b16 %v367, %v364
    %v407 = vpack.c.b16 %v371, %v368
    %v408 = vpack.c.b16 %v372, %v369
    %v409 = vpack.c.b16 %v373, %v370
    %v410 = vpack.c.b16 %v377, %v374
    %v411 = vpack.c.b16 %v378, %v375
    %v412 = vpack.c.b16 %v379, %v376
    %v413 = vpack.c.b16 %v383, %v380
    %v414 = vpack.c.b16 %v384, %v381
    %v415 = vpack.c.b16 %v385, %v382
    %v416 = vpack.c.b16 %v389, %v386
    %v417 = vpack.c.b16 %v390, %v387
    %v418 = vpack.c.b16 %v391, %v388
    %v419 = vpack.c.b16 %v395, %v392
    %v420 = vpack.c.b16 %v396, %v393
    %v421 = vpack.c.b16 %v397, %v394
    %446 = vmatprep.subr.bf16.mxu0 %v420
    %447 = vmatpush1.bf16.msra.mxu0 %v419
    %448 = vmatprep.subr.bf16.mxu0 %v417
    %449 = vmatpush1.bf16.msra.mxu0 %v416
    %450 = vmatprep.subr.bf16.mxu0 %v414
    %451 = vmatpush1.bf16.msra.mxu0 %v413
    %452 = vmatprep.subr.bf16.mxu0 %v411
    %453 = vmatpush1.bf16.msra.mxu0 %v410
    %454 = vmatprep.subr.bf16.mxu0 %v408
    %455 = vmatpush1.bf16.msra.mxu0 %v407
    %456 = vmatprep.subr.bf16.mxu0 %v405
    %457 = vmatpush1.bf16.msra.mxu0 %v404
    %458 = vmatprep.subr.bf16.mxu0 %v402
    %459 = vmatpush1.bf16.msra.mxu0 %v401
    %460 = vmatprep.subr.bf16.mxu0 %v399
    %461 = vmatpush1.bf16.msra.mxu0 %v398
    %462 = vmatprep.subr.bf16.mxu0 0
    %463 = vmatpush2.bf16.msra.mxu0 0
    %464 = vmatprep.subr.bf16.mxu0 0
    %465 = vmatpush2.bf16.msra.mxu0 0
    %466 = vmatprep.subr.bf16.mxu0 0
    %467 = vmatpush2.bf16.msra.mxu0 0
    %468 = vmatprep.subr.bf16.mxu0 0
    %469 = vmatpush2.bf16.msra.mxu0 0
    %470 = vmatprep.subr.bf16.mxu0 0
    %471 = vmatpush2.bf16.msra.mxu0 0
    %472 = vmatprep.subr.bf16.mxu0 0
    %473 = vmatpush2.bf16.msra.mxu0 0
    %474 = vmatprep.subr.bf16.mxu0 0
    %475 = vmatpush2.bf16.msra.mxu0 0
    %476 = vmatprep.subr.bf16.mxu0 0
    %477 = vmatpush2.bf16.msra.mxu0 0
    %478 = vmatprep.mubr.bf16.mxu0 0
    %479 = vmatmul.mubr.bf16.gmra.mxu0 %v285
    %v480 = vpop.f32.mrf.mxu0
    %v481 = vadd.f32 0.0, %v480
    %v482 = vpop.f32.mrf.mxu0
    %v483 = vadd.f32 0.0, %v482
    %v484 = vpop.f32.mrf.mxu0
    %v485 = vpop.f32.mrf.mxu0
    %486 = vdwg.mxu0
    %487 = vmatprep.subr.bf16.mxu0 0
    %488 = vmatpush1.bf16.msra.mxu0 %v421
    %489 = vmatprep.subr.bf16.mxu0 0
    %490 = vmatpush1.bf16.msra.mxu0 %v418
    %491 = vmatprep.subr.bf16.mxu0 0
    %492 = vmatpush1.bf16.msra.mxu0 %v415
    %493 = vmatprep.subr.bf16.mxu0 0
    %494 = vmatpush1.bf16.msra.mxu0 %v412
    %495 = vmatprep.subr.bf16.mxu0 0
    %496 = vmatpush1.bf16.msra.mxu0 %v409
    %497 = vmatprep.subr.bf16.mxu0 0
    %498 = vmatpush1.bf16.msra.mxu0 %v406
    %499 = vmatprep.subr.bf16.mxu0 0
    %500 = vmatpush1.bf16.msra.mxu0 %v403
    %501 = vmatprep.subr.bf16.mxu0 0
    %502 = vmatpush1.bf16.msra.mxu0 %v400
    %503 = vmatprep.subr.bf16.mxu0 0
    %504 = vmatpush2.bf16.msra.mxu0 0
    %505 = vmatprep.subr.bf16.mxu0 0
    %506 = vmatpush2.bf16.msra.mxu0 0
    %507 = vmatprep.subr.bf16.mxu0 0
    %508 = vmatpush2.bf16.msra.mxu0 0
    %509 = vmatprep.subr.bf16.mxu0 0
    %510 = vmatpush2.bf16.msra.mxu0 0
    %511 = vmatprep.subr.bf16.mxu0 0
    %512 = vmatpush2.bf16.msra.mxu0 0
    %513 = vmatprep.subr.bf16.mxu0 0
    %514 = vmatpush2.bf16.msra.mxu0 0
    %515 = vmatprep.subr.bf16.mxu0 0
    %516 = vmatpush2.bf16.msra.mxu0 0
    %517 = vmatprep.subr.bf16.mxu0 0
    %518 = vmatpush2.bf16.msra.mxu0 0
    %519 = vmatprep.mubr.bf16.mxu0 0
    %520 = vmatmul.mubr.bf16.gmra.mxu0 %v285
    %v521 = vpop.f32.mrf.mxu0
    %v522 = vadd.f32 0.0, %v521
    %v523 = vpop.f32.mrf.mxu0
    %v524 = vpop.f32.mrf.mxu0
    %v525 = vpop.f32.mrf.mxu0
    %526 = vdwg.mxu0
    %v527 = vadd.f32 %v239, %v481
    %v528 = vadd.f32 %v241, %v483
    %v529 = vld [vmem:[%s5] sm:$0x3]
    %v531 = vlaneseq
    %v532 = vshrl.u32 %v531, 7
    %v533 = vsub.s32 0, %v532
    %v534 = vrot.slane %v529, %v533
    %v535 = vlaneseq
    %v536 = vshrl.u32 %v535, 7
    %v537 = vsub.s32 1, %v536
    %v538 = vrot.slane %v529, %v537
    %v541 = vadd.f32 %v527, %v534
    %v542 = vadd.f32 %v528, %v538
    %v543 = vxor.u32 %v541, 2147483648
    %v544 = vxor.u32 %v542, 2147483648
    %v545 = vmul.f32 %v543, 1.442695
    %v546 = vpow.pop %v545
    %v547 = vmul.f32 %v544, 1.442695
    %v548 = vpow.pop %v547
    %v549 = vadd.f32 %v546, 1.0
    %v550 = vadd.f32 %v548, 1.0
    %v551 = vrcp.pop %v549
    %v552 = vmul.f32 1.0, %v551
    %v553 = vrcp.pop %v550
    %v554 = vmul.f32 1.0, %v553
    %v555 = vld [vmem:[%s6] sm:$0x1]
    %v557 = vlaneseq
    %v558 = vshrl.u32 %v557, 7
    %v559 = vsub.s32 0, %v558
    %v560 = vrot.slane %v555, %v559
    %v562 = vadd.f32 %v280, %v560
    %v563 = vld [vmem:[%s7] sm:$0x1]
    %v565 = vlaneseq
    %v566 = vshrl.u32 %v565, 7
    %v567 = vsub.s32 0, %v566
    %v568 = vrot.slane %v563, %v567
    %v570 = vadd.f32 %v522, %v568
    %v571 = vmul.f32 %v552, %v570
    %v572 = vadd.f32 %v562, %v571
    %v573 = vtanh.pop %v572
    %v574 = vsub.f32 1.0, %v554
    %v575 = vmul.f32 %v574, %v573
    %v576 = vmul.f32 %v554, %v159
    %v577 = vadd.f32 %v575, %v576
    %578 = vst [vmem:[#allocation17] sm:$0xff] %v577
    %v579 = vpack.c.bf16 %v577, %v577
    %v580 = vld [vmem:[#allocation11] sm:$0xff]
    %v581 = vld [vmem:[#allocation11 + $0x8] sm:$0xff]
    %v582 = vld [vmem:[#allocation11 + $0x10] sm:$0xff]
    %v583 = vld [vmem:[#allocation11 + $0x18] sm:$0xff]
    %v584 = vld [vmem:[#allocation11 + $0x20] sm:$0xff]
    %v585 = vld [vmem:[#allocation11 + $0x28] sm:$0xff]
    %v586 = vld [vmem:[#allocation11 + $0x30] sm:$0xff]
    %v587 = vld [vmem:[#allocation11 + $0x38] sm:$0xff]
    %v588 = vld [vmem:[#allocation11 + $0x40] sm:$0xff]
    %v589 = vld [vmem:[#allocation11 + $0x48] sm:$0xff]
    %v590 = vld [vmem:[#allocation11 + $0x50] sm:$0xff]
    %v591 = vld [vmem:[#allocation11 + $0x58] sm:$0xff]
    %v592 = vld [vmem:[#allocation11 + $0x60] sm:$0xff]
    %v593 = vld [vmem:[#allocation11 + $0x68] sm:$0xff]
    %v594 = vld [vmem:[#allocation11 + $0x70] sm:$0xff]
    %v595 = vld [vmem:[#allocation11 + $0x78] sm:$0xff]
    %v612 = vunpack.c.l.b16 %v580
    %v613 = vunpack.c.h.b16 %v580
    %v614 = vunpack.c.l.b16 %v581
    %v615 = vunpack.c.h.b16 %v581
    %v616 = vunpack.c.l.b16 %v582
    %v617 = vunpack.c.h.b16 %v582
    %v618 = vunpack.c.l.b16 %v583
    %v619 = vunpack.c.h.b16 %v583
    %v620 = vunpack.c.l.b16 %v584
    %v621 = vunpack.c.h.b16 %v584
    %v622 = vunpack.c.l.b16 %v585
    %v623 = vunpack.c.h.b16 %v585
    %v624 = vunpack.c.l.b16 %v586
    %v625 = vunpack.c.h.b16 %v586
    %v626 = vunpack.c.l.b16 %v587
    %v627 = vunpack.c.h.b16 %v587
    %v628 = vunpack.c.l.b16 %v588
    %v629 = vunpack.c.h.b16 %v588
    %v630 = vunpack.c.l.b16 %v589
    %v631 = vunpack.c.h.b16 %v589
    %v632 = vunpack.c.l.b16 %v590
    %v633 = vunpack.c.h.b16 %v590
    %v634 = vunpack.c.l.b16 %v591
    %v635 = vunpack.c.h.b16 %v591
    %v636 = vunpack.c.l.b16 %v592
    %v637 = vunpack.c.h.b16 %v592
    %v638 = vunpack.c.l.b16 %v593
    %v639 = vunpack.c.h.b16 %v593
    %v640 = vunpack.c.l.b16 %v594
    %v641 = vunpack.c.h.b16 %v594
    %v642 = vunpack.c.l.b16 %v595
    %v643 = vunpack.c.h.b16 %v595
    %v644 = vpack.c.b16 %v614, %v612
    %v645 = vpack.c.b16 %v615, %v613
    %v646 = vpack.c.b16 %v618, %v616
    %v647 = vpack.c.b16 %v619, %v617
    %v648 = vpack.c.b16 %v622, %v620
    %v649 = vpack.c.b16 %v623, %v621
    %v650 = vpack.c.b16 %v626, %v624
    %v651 = vpack.c.b16 %v627, %v625
    %v652 = vpack.c.b16 %v630, %v628
    %v653 = vpack.c.b16 %v631, %v629
    %v654 = vpack.c.b16 %v634, %v632
    %v655 = vpack.c.b16 %v635, %v633
    %v656 = vpack.c.b16 %v638, %v636
    %v657 = vpack.c.b16 %v639, %v637
    %v658 = vpack.c.b16 %v642, %v640
    %v659 = vpack.c.b16 %v643, %v641
    %676 = vmatprep.subr.bf16.mxu0 %v659
    %677 = vmatpush1.bf16.msra.mxu0 %v658
    %678 = vmatprep.subr.bf16.mxu0 %v657
    %679 = vmatpush1.bf16.msra.mxu0 %v656
    %680 = vmatprep.subr.bf16.mxu0 %v655
    %681 = vmatpush1.bf16.msra.mxu0 %v654
    %682 = vmatprep.subr.bf16.mxu0 %v653
    %683 = vmatpush1.bf16.msra.mxu0 %v652
    %684 = vmatprep.subr.bf16.mxu0 %v651
    %685 = vmatpush1.bf16.msra.mxu0 %v650
    %686 = vmatprep.subr.bf16.mxu0 %v649
    %687 = vmatpush1.bf16.msra.mxu0 %v648
    %688 = vmatprep.subr.bf16.mxu0 %v647
    %689 = vmatpush1.bf16.msra.mxu0 %v646
    %690 = vmatprep.subr.bf16.mxu0 %v645
    %691 = vmatpush1.bf16.msra.mxu0 %v644
    %692 = vmatprep.subr.bf16.mxu0 0
    %693 = vmatpush2.bf16.msra.mxu0 0
    %694 = vmatprep.subr.bf16.mxu0 0
    %695 = vmatpush2.bf16.msra.mxu0 0
    %696 = vmatprep.subr.bf16.mxu0 0
    %697 = vmatpush2.bf16.msra.mxu0 0
    %698 = vmatprep.subr.bf16.mxu0 0
    %699 = vmatpush2.bf16.msra.mxu0 0
    %700 = vmatprep.subr.bf16.mxu0 0
    %701 = vmatpush2.bf16.msra.mxu0 0
    %702 = vmatprep.subr.bf16.mxu0 0
    %703 = vmatpush2.bf16.msra.mxu0 0
    %704 = vmatprep.subr.bf16.mxu0 0
    %705 = vmatpush2.bf16.msra.mxu0 0
    %706 = vmatprep.subr.bf16.mxu0 0
    %707 = vmatpush2.bf16.msra.mxu0 0
    %708 = vmatprep.mubr.bf16.mxu0 0
    %709 = vmatmul.mubr.bf16.gmra.mxu0 %v579
    %v710 = vpop.f32.mrf.mxu0
    %v711 = vadd.f32 0.0, %v710
    %v712 = vpop.f32.mrf.mxu0
    %v713 = vadd.f32 0.0, %v712
    %v714 = vpop.f32.mrf.mxu0
    %v715 = vpop.f32.mrf.mxu0
    %716 = vdwg.mxu0
    %v717 = vld [vmem:[%s9] sm:$0x1]
    %v719 = vlaneseq
    %v720 = vshrl.u32 %v719, 7
    %v721 = vsub.s32 0, %v720
    %v722 = vrot.slane %v717, %v721
    %v724 = vmul.f32 %v577, %v722
    %725 = vadd.xlane.f32.xlu0 %v724
    %v726 = vpop.xlane.xlu0 %725
    %v727 = vld [vmem:[#allocation7] sm:$0xff]
    %v728 = vld [vmem:[#allocation7 + $0x8] sm:$0xff]
    %v729 = vld [vmem:[#allocation7 + $0x10] sm:$0xff]
    %v730 = vld [vmem:[#allocation7 + $0x18] sm:$0xff]
    %v731 = vld [vmem:[#allocation7 + $0x20] sm:$0xff]
    %v732 = vld [vmem:[#allocation7 + $0x28] sm:$0xff]
    %v733 = vld [vmem:[#allocation7 + $0x30] sm:$0xff]
    %v734 = vld [vmem:[#allocation7 + $0x38] sm:$0xff]
    %v735 = vld [vmem:[#allocation7 + $0x40] sm:$0xff]
    %v736 = vld [vmem:[#allocation7 + $0x48] sm:$0xff]
    %v737 = vld [vmem:[#allocation7 + $0x50] sm:$0xff]
    %v738 = vld [vmem:[#allocation7 + $0x58] sm:$0xff]
    %v739 = vld [vmem:[#allocation7 + $0x60] sm:$0xff]
    %v740 = vld [vmem:[#allocation7 + $0x68] sm:$0xff]
    %v741 = vld [vmem:[#allocation7 + $0x70] sm:$0xff]
    %v742 = vld [vmem:[#allocation7 + $0x78] sm:$0xff]
    %v744 = vcombine.high %v711, %v711
    %v746 = vunpack.c.l.s4 1966171168
    %v747 = vunpack.c.0.s8 %v746
    %v748 = vlaneseq
    %v749 = vshrl.u32 %v748, 7
    %v750 = vsub.s32 %v747, %v749
    %v751 = vrot.slane %v711, %v750
    %v753 = vunpack.c.l.s4 1966171168
    %v754 = vunpack.c.0.s8 %v753
    %v755 = vlaneseq
    %v756 = vshrl.u32 %v755, 7
    %v757 = vsub.s32 %v754, %v756
    %v758 = vrot.slane %v744, %v757
    %v759 = vcombine.high %v751, %v751
    %v760 = vcombine.high %v758, %v758
    %v762 = vunpack.c.l.s4 1966171168
    %v763 = vunpack.c.0.s8 %v762
    %v764 = vlaneseq
    %v765 = vshrl.u32 %v764, 7
    %v766 = vsub.s32 %v763, %v765
    %v767 = vrot.slane %v751, %v766
    %v769 = vunpack.c.l.s4 1966171168
    %v770 = vunpack.c.0.s8 %v769
    %v771 = vlaneseq
    %v772 = vshrl.u32 %v771, 7
    %v773 = vsub.s32 %v770, %v772
    %v774 = vrot.slane %v758, %v773
    %v776 = vunpack.c.l.s4 1966171168
    %v777 = vunpack.c.0.s8 %v776
    %v778 = vlaneseq
    %v779 = vshrl.u32 %v778, 7
    %v780 = vsub.s32 %v777, %v779
    %v781 = vrot.slane %v759, %v780
    %v783 = vunpack.c.l.s4 1966171168
    %v784 = vunpack.c.0.s8 %v783
    %v785 = vlaneseq
    %v786 = vshrl.u32 %v785, 7
    %v787 = vsub.s32 %v784, %v786
    %v788 = vrot.slane %v760, %v787
    %v789 = vcombine.high %v767, %v767
    %v790 = vcombine.high %v774, %v774
    %v791 = vcombine.high %v781, %v781
    %v792 = vcombine.high %v788, %v788
    %v793 = vlaneseq
    %v794 = vshrl.u32 %v793, 7
    %v795 = vsub.s32 0, %v794
    %v796 = vrot.slane %v767, %v795
    %v797 = vlaneseq
    %v798 = vshrl.u32 %v797, 7
    %v799 = vsub.s32 0, %v798
    %v800 = vrot.slane %v781, %v799
    %v801 = vlaneseq
    %v802 = vshrl.u32 %v801, 7
    %v803 = vsub.s32 0, %v802
    %v804 = vrot.slane %v789, %v803
    %v805 = vlaneseq
    %v806 = vshrl.u32 %v805, 7
    %v807 = vsub.s32 0, %v806
    %v808 = vrot.slane %v791, %v807
    %v809 = vlaneseq
    %v810 = vshrl.u32 %v809, 7
    %v811 = vsub.s32 0, %v810
    %v812 = vrot.slane %v774, %v811
    %v813 = vlaneseq
    %v814 = vshrl.u32 %v813, 7
    %v815 = vsub.s32 0, %v814
    %v816 = vrot.slane %v788, %v815
    %v817 = vlaneseq
    %v818 = vshrl.u32 %v817, 7
    %v819 = vsub.s32 0, %v818
    %v820 = vrot.slane %v790, %v819
    %v821 = vlaneseq
    %v822 = vshrl.u32 %v821, 7
    %v823 = vsub.s32 0, %v822
    %v824 = vrot.slane %v792, %v823
    %v833 = vmul.f32 %v727, %v796
    %v834 = vmul.f32 %v728, %v796
    %v835 = vmul.f32 %v729, %v800
    %v836 = vmul.f32 %v730, %v800
    %v837 = vmul.f32 %v731, %v804
    %v838 = vmul.f32 %v732, %v804
    %v839 = vmul.f32 %v733, %v808
    %v840 = vmul.f32 %v734, %v808
    %v841 = vmul.f32 %v735, %v812
    %v842 = vmul.f32 %v736, %v812
    %v843 = vmul.f32 %v737, %v816
    %v844 = vmul.f32 %v738, %v816
    %v845 = vmul.f32 %v739, %v820
    %v846 = vmul.f32 %v740, %v820
    %v847 = vmul.f32 %v741, %v824
    %v848 = vmul.f32 %v742, %v824
    %849 = vadd.xlane.f32.xlu0 %v833
    %v850 = vpop.xlane.xlu0 %849
    %851 = vadd.xlane.f32.xlu0 %v834
    %v852 = vpop.xlane.xlu0 %851
    %853 = vadd.xlane.f32.xlu0 %v835
    %v854 = vpop.xlane.xlu0 %853
    %855 = vadd.xlane.f32.xlu0 %v836
    %v856 = vpop.xlane.xlu0 %855
    %857 = vadd.xlane.f32.xlu0 %v837
    %v858 = vpop.xlane.xlu0 %857
    %859 = vadd.xlane.f32.xlu0 %v838
    %v860 = vpop.xlane.xlu0 %859
    %861 = vadd.xlane.f32.xlu0 %v839
    %v862 = vpop.xlane.xlu0 %861
    %863 = vadd.xlane.f32.xlu0 %v840
    %v864 = vpop.xlane.xlu0 %863
    %865 = vadd.xlane.f32.xlu0 %v841
    %v866 = vpop.xlane.xlu0 %865
    %867 = vadd.xlane.f32.xlu0 %v842
    %v868 = vpop.xlane.xlu0 %867
    %869 = vadd.xlane.f32.xlu0 %v843
    %v870 = vpop.xlane.xlu0 %869
    %871 = vadd.xlane.f32.xlu0 %v844
    %v872 = vpop.xlane.xlu0 %871
    %873 = vadd.xlane.f32.xlu0 %v845
    %v874 = vpop.xlane.xlu0 %873
    %875 = vadd.xlane.f32.xlu0 %v846
    %v876 = vpop.xlane.xlu0 %875
    %877 = vadd.xlane.f32.xlu0 %v847
    %v878 = vpop.xlane.xlu0 %877
    %879 = vadd.xlane.f32.xlu0 %v848
    %v880 = vpop.xlane.xlu0 %879
    %v882 = vlaneseq
    %v883 = vshrl.u32 %v882, 7
    %v884 = vsub.s32 0, %v883
    %v885 = vrot.slane %v726, %v884
    %v886 = vlaneseq
    %v887 = vshrl.u32 %v886, 7
    %v888 = vsub.s32 1, %v887
    %v889 = vrot.slane %v726, %v888
    %v890 = vlaneseq
    %v891 = vshrl.u32 %v890, 7
    %v892 = vsub.s32 2, %v891
    %v893 = vrot.slane %v726, %v892
    %v894 = vlaneseq
    %v895 = vshrl.u32 %v894, 7
    %v896 = vsub.s32 3, %v895
    %v897 = vrot.slane %v726, %v896
    %v898 = vlaneseq
    %v899 = vshrl.u32 %v898, 7
    %v900 = vsub.s32 4, %v899
    %v901 = vrot.slane %v726, %v900
    %v902 = vlaneseq
    %v903 = vshrl.u32 %v902, 7
    %v904 = vsub.s32 5, %v903
    %v905 = vrot.slane %v726, %v904
    %v906 = vlaneseq
    %v907 = vshrl.u32 %v906, 7
    %v908 = vsub.s32 6, %v907
    %v909 = vrot.slane %v726, %v908
    %v910 = vlaneseq
    %v911 = vshrl.u32 %v910, 7
    %v912 = vsub.s32 7, %v911
    %v913 = vrot.slane %v726, %v912
    %v922 = vadd.f32 %v850, %v885
    %v923 = vadd.f32 %v852, %v885
    %v924 = vadd.f32 %v854, %v889
    %v925 = vadd.f32 %v856, %v889
    %v926 = vadd.f32 %v858, %v893
    %v927 = vadd.f32 %v860, %v893
    %v928 = vadd.f32 %v862, %v897
    %v929 = vadd.f32 %v864, %v897
    %v930 = vadd.f32 %v866, %v901
    %v931 = vadd.f32 %v868, %v901
    %v932 = vadd.f32 %v870, %v905
    %v933 = vadd.f32 %v872, %v905
    %v934 = vadd.f32 %v874, %v909
    %v935 = vadd.f32 %v876, %v909
    %v936 = vadd.f32 %v878, %v913
    %v937 = vadd.f32 %v880, %v913
    %954 = vset.pattern.permute.xlu0 0
    %955 = vperm.xlu0 %954, %v922
    %v956 = vpop.permute.xlu0 %955
    %957 = vset.pattern.permute.xlu0 0
    %958 = vperm.xlu0 %957, %v923
    %v959 = vpop.permute.xlu0 %958
    %960 = vset.pattern.permute.xlu0 0
    %961 = vperm.xlu0 %960, %v924
    %v962 = vpop.permute.xlu0 %961
    %963 = vset.pattern.permute.xlu0 0
    %964 = vperm.xlu0 %963, %v925
    %v965 = vpop.permute.xlu0 %964
    %966 = vset.pattern.permute.xlu0 0
    %967 = vperm.xlu0 %966, %v926
    %v968 = vpop.permute.xlu0 %967
    %969 = vset.pattern.permute.xlu0 0
    %970 = vperm.xlu0 %969, %v927
    %v971 = vpop.permute.xlu0 %970
    %972 = vset.pattern.permute.xlu0 0
    %973 = vperm.xlu0 %972, %v928
    %v974 = vpop.permute.xlu0 %973
    %975 = vset.pattern.permute.xlu0 0
    %976 = vperm.xlu0 %975, %v929
    %v977 = vpop.permute.xlu0 %976
    %978 = vset.pattern.permute.xlu0 0
    %979 = vperm.xlu0 %978, %v930
    %v980 = vpop.permute.xlu0 %979
    %981 = vset.pattern.permute.xlu0 0
    %982 = vperm.xlu0 %981, %v931
    %v983 = vpop.permute.xlu0 %982
    %984 = vset.pattern.permute.xlu0 0
    %985 = vperm.xlu0 %984, %v932
    %v986 = vpop.permute.xlu0 %985
    %987 = vset.pattern.permute.xlu0 0
    %988 = vperm.xlu0 %987, %v933
    %v989 = vpop.permute.xlu0 %988
    %990 = vset.pattern.permute.xlu0 0
    %991 = vperm.xlu0 %990, %v934
    %v992 = vpop.permute.xlu0 %991
    %993 = vset.pattern.permute.xlu0 0
    %994 = vperm.xlu0 %993, %v935
    %v995 = vpop.permute.xlu0 %994
    %996 = vset.pattern.permute.xlu0 0
    %997 = vperm.xlu0 %996, %v936
    %v998 = vpop.permute.xlu0 %997
    %999 = vset.pattern.permute.xlu0 0
    %1000 = vperm.xlu0 %999, %v937
    %v1001 = vpop.permute.xlu0 %1000
    %v1002 = vlaneseq
    %v1003 = vand.u32 %v1002, 127
    %v1004 = vlaneseq
    %v1005 = vshrl.u32 %v1004, 7
    %v1006 = vsub.s32 %v1003, %v1005
    %v1007 = vrot.slane %v956, %v1006
    %v1008 = vadd.s32 %v1003, 4294967288
    %v1009 = vlaneseq
    %v1010 = vshrl.u32 %v1009, 7
    %v1011 = vsub.s32 %v1008, %v1010
    %v1012 = vrot.slane %v959, %v1011
    %vm1013 = vcmask 130112
    %v1014 = vsel %vm1013, %v1012, %v1007
    %v1015 = vlaneseq
    %v1016 = vshrl.u32 %v1015, 7
    %v1017 = vsub.s32 %v1003, %v1016
    %v1018 = vrot.slane %v962, %v1017
    %v1019 = vlaneseq
    %v1020 = vshrl.u32 %v1019, 7
    %v1021 = vsub.s32 %v1008, %v1020
    %v1022 = vrot.slane %v965, %v1021
    %v1023 = vsel %vm1013, %v1022, %v1018
    %v1024 = vlaneseq
    %v1025 = vshrl.u32 %v1024, 7
    %v1026 = vsub.s32 %v1003, %v1025
    %v1027 = vrot.slane %v968, %v1026
    %v1028 = vlaneseq
    %v1029 = vshrl.u32 %v1028, 7
    %v1030 = vsub.s32 %v1008, %v1029
    %v1031 = vrot.slane %v971, %v1030
    %v1032 = vsel %vm1013, %v1031, %v1027
    %v1033 = vlaneseq
    %v1034 = vshrl.u32 %v1033, 7
    %v1035 = vsub.s32 %v1003, %v1034
    %v1036 = vrot.slane %v974, %v1035
    %v1037 = vlaneseq
    %v1038 = vshrl.u32 %v1037, 7
    %v1039 = vsub.s32 %v1008, %v1038
    %v1040 = vrot.slane %v977, %v1039
    %v1041 = vsel %vm1013, %v1040, %v1036
    %v1042 = vlaneseq
    %v1043 = vshrl.u32 %v1042, 7
    %v1044 = vsub.s32 %v1003, %v1043
    %v1045 = vrot.slane %v980, %v1044
    %v1046 = vlaneseq
    %v1047 = vshrl.u32 %v1046, 7
    %v1048 = vsub.s32 %v1008, %v1047
    %v1049 = vrot.slane %v983, %v1048
    %v1050 = vsel %vm1013, %v1049, %v1045
    %v1051 = vlaneseq
    %v1052 = vshrl.u32 %v1051, 7
    %v1053 = vsub.s32 %v1003, %v1052
    %v1054 = vrot.slane %v986, %v1053
    %v1055 = vlaneseq
    %v1056 = vshrl.u32 %v1055, 7
    %v1057 = vsub.s32 %v1008, %v1056
    %v1058 = vrot.slane %v989, %v1057
    %v1059 = vsel %vm1013, %v1058, %v1054
    %v1060 = vlaneseq
    %v1061 = vshrl.u32 %v1060, 7
    %v1062 = vsub.s32 %v1003, %v1061
    %v1063 = vrot.slane %v992, %v1062
    %v1064 = vlaneseq
    %v1065 = vshrl.u32 %v1064, 7
    %v1066 = vsub.s32 %v1008, %v1065
    %v1067 = vrot.slane %v995, %v1066
    %v1068 = vsel %vm1013, %v1067, %v1063
    %v1069 = vlaneseq
    %v1070 = vshrl.u32 %v1069, 7
    %v1071 = vsub.s32 %v1003, %v1070
    %v1072 = vrot.slane %v998, %v1071
    %v1073 = vlaneseq
    %v1074 = vshrl.u32 %v1073, 7
    %v1075 = vsub.s32 %v1008, %v1074
    %v1076 = vrot.slane %v1001, %v1075
    %v1077 = vsel %vm1013, %v1076, %v1072
    %vm1078 = vcmask 1041409
    %v1079 = vsel %vm1078, %v1023, %v1014
    %vm1080 = vcmask 1042434
    %v1081 = vsel %vm1080, %v1032, %v1079
    %vm1082 = vcmask 1043459
    %v1083 = vsel %vm1082, %v1041, %v1081
    %vm1084 = vcmask 1044484
    %v1085 = vsel %vm1084, %v1050, %v1083
    %vm1086 = vcmask 1045509
    %v1087 = vsel %vm1086, %v1059, %v1085
    %vm1088 = vcmask 1046534
    %v1089 = vsel %vm1088, %v1068, %v1087
    %vm1090 = vcmask 1047559
    %v1091 = vsel %vm1090, %v1077, %v1089
    %vm1093 = vcmask 130048
    %v1094 = vsel %vm1093, %v1091, -inf
    %1095 = vmax.xlane.f32.xlu0 %v1094
    %v1096 = vpop.xlane.xlu0 %1095
    %v1098 = vlaneseq
    %v1099 = vshrl.u32 %v1098, 7
    %v1100 = vsub.s32 0, %v1099
    %v1101 = vrot.slane %v1096, %v1100
    %v1102 = vlaneseq
    %v1103 = vshrl.u32 %v1102, 7
    %v1104 = vsub.s32 1, %v1103
    %v1105 = vrot.slane %v1096, %v1104
    %v1106 = vlaneseq
    %v1107 = vshrl.u32 %v1106, 7
    %v1108 = vsub.s32 2, %v1107
    %v1109 = vrot.slane %v1096, %v1108
    %v1110 = vlaneseq
    %v1111 = vshrl.u32 %v1110, 7
    %v1112 = vsub.s32 3, %v1111
    %v1113 = vrot.slane %v1096, %v1112
    %v1114 = vlaneseq
    %v1115 = vshrl.u32 %v1114, 7
    %v1116 = vsub.s32 4, %v1115
    %v1117 = vrot.slane %v1096, %v1116
    %v1118 = vlaneseq
    %v1119 = vshrl.u32 %v1118, 7
    %v1120 = vsub.s32 5, %v1119
    %v1121 = vrot.slane %v1096, %v1120
    %v1122 = vlaneseq
    %v1123 = vshrl.u32 %v1122, 7
    %v1124 = vsub.s32 6, %v1123
    %v1125 = vrot.slane %v1096, %v1124
    %v1126 = vlaneseq
    %v1127 = vshrl.u32 %v1126, 7
    %v1128 = vsub.s32 7, %v1127
    %v1129 = vrot.slane %v1096, %v1128
    %v1138 = vsub.f32 %v922, %v1101
    %v1139 = vsub.f32 %v923, %v1101
    %v1140 = vsub.f32 %v924, %v1105
    %v1141 = vsub.f32 %v925, %v1105
    %v1142 = vsub.f32 %v926, %v1109
    %v1143 = vsub.f32 %v927, %v1109
    %v1144 = vsub.f32 %v928, %v1113
    %v1145 = vsub.f32 %v929, %v1113
    %v1146 = vsub.f32 %v930, %v1117
    %v1147 = vsub.f32 %v931, %v1117
    %v1148 = vsub.f32 %v932, %v1121
    %v1149 = vsub.f32 %v933, %v1121
    %v1150 = vsub.f32 %v934, %v1125
    %v1151 = vsub.f32 %v935, %v1125
    %v1152 = vsub.f32 %v936, %v1129
    %v1153 = vsub.f32 %v937, %v1129
    %v1154 = vmul.f32 %v1138, 1.442695
    %v1155 = vpow.pop %v1154
    %v1156 = vmul.f32 %v1139, 1.442695
    %v1157 = vpow.pop %v1156
    %v1158 = vmul.f32 %v1140, 1.442695
    %v1159 = vpow.pop %v1158
    %v1160 = vmul.f32 %v1141, 1.442695
    %v1161 = vpow.pop %v1160
    %v1162 = vmul.f32 %v1142, 1.442695
    %v1163 = vpow.pop %v1162
    %v1164 = vmul.f32 %v1143, 1.442695
    %v1165 = vpow.pop %v1164
    %v1166 = vmul.f32 %v1144, 1.442695
    %v1167 = vpow.pop %v1166
    %v1168 = vmul.f32 %v1145, 1.442695
    %v1169 = vpow.pop %v1168
    %v1170 = vmul.f32 %v1146, 1.442695
    %v1171 = vpow.pop %v1170
    %v1172 = vmul.f32 %v1147, 1.442695
    %v1173 = vpow.pop %v1172
    %v1174 = vmul.f32 %v1148, 1.442695
    %v1175 = vpow.pop %v1174
    %v1176 = vmul.f32 %v1149, 1.442695
    %v1177 = vpow.pop %v1176
    %v1178 = vmul.f32 %v1150, 1.442695
    %v1179 = vpow.pop %v1178
    %v1180 = vmul.f32 %v1151, 1.442695
    %v1181 = vpow.pop %v1180
    %v1182 = vmul.f32 %v1152, 1.442695
    %v1183 = vpow.pop %v1182
    %v1184 = vmul.f32 %v1153, 1.442695
    %v1185 = vpow.pop %v1184
    %1202 = vset.pattern.permute.xlu0 0
    %1203 = vperm.xlu0 %1202, %v1155
    %v1204 = vpop.permute.xlu0 %1203
    %1205 = vset.pattern.permute.xlu0 0
    %1206 = vperm.xlu0 %1205, %v1157
    %v1207 = vpop.permute.xlu0 %1206
    %1208 = vset.pattern.permute.xlu0 0
    %1209 = vperm.xlu0 %1208, %v1159
    %v1210 = vpop.permute.xlu0 %1209
    %1211 = vset.pattern.permute.xlu0 0
    %1212 = vperm.xlu0 %1211, %v1161
    %v1213 = vpop.permute.xlu0 %1212
    %1214 = vset.pattern.permute.xlu0 0
    %1215 = vperm.xlu0 %1214, %v1163
    %v1216 = vpop.permute.xlu0 %1215
    %1217 = vset.pattern.permute.xlu0 0
    %1218 = vperm.xlu0 %1217, %v1165
    %v1219 = vpop.permute.xlu0 %1218
    %1220 = vset.pattern.permute.xlu0 0
    %1221 = vperm.xlu0 %1220, %v1167
    %v1222 = vpop.permute.xlu0 %1221
    %1223 = vset.pattern.permute.xlu0 0
    %1224 = vperm.xlu0 %1223, %v1169
    %v1225 = vpop.permute.xlu0 %1224
    %1226 = vset.pattern.permute.xlu0 0
    %1227 = vperm.xlu0 %1226, %v1171
    %v1228 = vpop.permute.xlu0 %1227
    %1229 = vset.pattern.permute.xlu0 0
    %1230 = vperm.xlu0 %1229, %v1173
    %v1231 = vpop.permute.xlu0 %1230
    %1232 = vset.pattern.permute.xlu0 0
    %1233 = vperm.xlu0 %1232, %v1175
    %v1234 = vpop.permute.xlu0 %1233
    %1235 = vset.pattern.permute.xlu0 0
    %1236 = vperm.xlu0 %1235, %v1177
    %v1237 = vpop.permute.xlu0 %1236
    %1238 = vset.pattern.permute.xlu0 0
    %1239 = vperm.xlu0 %1238, %v1179
    %v1240 = vpop.permute.xlu0 %1239
    %1241 = vset.pattern.permute.xlu0 0
    %1242 = vperm.xlu0 %1241, %v1181
    %v1243 = vpop.permute.xlu0 %1242
    %1244 = vset.pattern.permute.xlu0 0
    %1245 = vperm.xlu0 %1244, %v1183
    %v1246 = vpop.permute.xlu0 %1245
    %1247 = vset.pattern.permute.xlu0 0
    %1248 = vperm.xlu0 %1247, %v1185
    %v1249 = vpop.permute.xlu0 %1248
    %v1250 = vlaneseq
    %v1251 = vshrl.u32 %v1250, 7
    %v1252 = vsub.s32 %v1003, %v1251
    %v1253 = vrot.slane %v1204, %v1252
    %v1254 = vlaneseq
    %v1255 = vshrl.u32 %v1254, 7
    %v1256 = vsub.s32 %v1008, %v1255
    %v1257 = vrot.slane %v1207, %v1256
    %v1258 = vsel %vm1013, %v1257, %v1253
    %v1259 = vlaneseq
    %v1260 = vshrl.u32 %v1259, 7
    %v1261 = vsub.s32 %v1003, %v1260
    %v1262 = vrot.slane %v1210, %v1261
    %v1263 = vlaneseq
    %v1264 = vshrl.u32 %v1263, 7
    %v1265 = vsub.s32 %v1008, %v1264
    %v1266 = vrot.slane %v1213, %v1265
    %v1267 = vsel %vm1013, %v1266, %v1262
    %v1268 = vlaneseq
    %v1269 = vshrl.u32 %v1268, 7
    %v1270 = vsub.s32 %v1003, %v1269
    %v1271 = vrot.slane %v1216, %v1270
    %v1272 = vlaneseq
    %v1273 = vshrl.u32 %v1272, 7
    %v1274 = vsub.s32 %v1008, %v1273
    %v1275 = vrot.slane %v1219, %v1274
    %v1276 = vsel %vm1013, %v1275, %v1271
    %v1277 = vlaneseq
    %v1278 = vshrl.u32 %v1277, 7
    %v1279 = vsub.s32 %v1003, %v1278
    %v1280 = vrot.slane %v1222, %v1279
    %v1281 = vlaneseq
    %v1282 = vshrl.u32 %v1281, 7
    %v1283 = vsub.s32 %v1008, %v1282
    %v1284 = vrot.slane %v1225, %v1283
    %v1285 = vsel %vm1013, %v1284, %v1280
    %v1286 = vlaneseq
    %v1287 = vshrl.u32 %v1286, 7
    %v1288 = vsub.s32 %v1003, %v1287
    %v1289 = vrot.slane %v1228, %v1288
    %v1290 = vlaneseq
    %v1291 = vshrl.u32 %v1290, 7
    %v1292 = vsub.s32 %v1008, %v1291
    %v1293 = vrot.slane %v1231, %v1292
    %v1294 = vsel %vm1013, %v1293, %v1289
    %v1295 = vlaneseq
    %v1296 = vshrl.u32 %v1295, 7
    %v1297 = vsub.s32 %v1003, %v1296
    %v1298 = vrot.slane %v1234, %v1297
    %v1299 = vlaneseq
    %v1300 = vshrl.u32 %v1299, 7
    %v1301 = vsub.s32 %v1008, %v1300
    %v1302 = vrot.slane %v1237, %v1301
    %v1303 = vsel %vm1013, %v1302, %v1298
    %v1304 = vlaneseq
    %v1305 = vshrl.u32 %v1304, 7
    %v1306 = vsub.s32 %v1003, %v1305
    %v1307 = vrot.slane %v1240, %v1306
    %v1308 = vlaneseq
    %v1309 = vshrl.u32 %v1308, 7
    %v1310 = vsub.s32 %v1008, %v1309
    %v1311 = vrot.slane %v1243, %v1310
    %v1312 = vsel %vm1013, %v1311, %v1307
    %v1313 = vlaneseq
    %v1314 = vshrl.u32 %v1313, 7
    %v1315 = vsub.s32 %v1003, %v1314
    %v1316 = vrot.slane %v1246, %v1315
    %v1317 = vlaneseq
    %v1318 = vshrl.u32 %v1317, 7
    %v1319 = vsub.s32 %v1008, %v1318
    %v1320 = vrot.slane %v1249, %v1319
    %v1321 = vsel %vm1013, %v1320, %v1316
    %v1322 = vsel %vm1078, %v1267, %v1258
    %v1323 = vsel %vm1080, %v1276, %v1322
    %v1324 = vsel %vm1082, %v1285, %v1323
    %v1325 = vsel %vm1084, %v1294, %v1324
    %v1326 = vsel %vm1086, %v1303, %v1325
    %v1327 = vsel %vm1088, %v1312, %v1326
    %v1328 = vsel %vm1090, %v1321, %v1327
    %v1330 = vsel %vm1093, %v1328, 0.0
    %1331 = vadd.xlane.f32.xlu0 %v1330
    %v1332 = vpop.xlane.xlu0 %1331
    %v1333 = vrcp.pop %v1332
    %v1335 = vlaneseq
    %v1336 = vshrl.u32 %v1335, 7
    %v1337 = vsub.s32 0, %v1336
    %v1338 = vrot.slane %v1333, %v1337
    %v1339 = vlaneseq
    %v1340 = vshrl.u32 %v1339, 7
    %v1341 = vsub.s32 1, %v1340
    %v1342 = vrot.slane %v1333, %v1341
    %v1343 = vlaneseq
    %v1344 = vshrl.u32 %v1343, 7
    %v1345 = vsub.s32 2, %v1344
    %v1346 = vrot.slane %v1333, %v1345
    %v1347 = vlaneseq
    %v1348 = vshrl.u32 %v1347, 7
    %v1349 = vsub.s32 3, %v1348
    %v1350 = vrot.slane %v1333, %v1349
    %v1351 = vlaneseq
    %v1352 = vshrl.u32 %v1351, 7
    %v1353 = vsub.s32 4, %v1352
    %v1354 = vrot.slane %v1333, %v1353
    %v1355 = vlaneseq
    %v1356 = vshrl.u32 %v1355, 7
    %v1357 = vsub.s32 5, %v1356
    %v1358 = vrot.slane %v1333, %v1357
    %v1359 = vlaneseq
    %v1360 = vshrl.u32 %v1359, 7
    %v1361 = vsub.s32 6, %v1360
    %v1362 = vrot.slane %v1333, %v1361
    %v1363 = vlaneseq
    %v1364 = vshrl.u32 %v1363, 7
    %v1365 = vsub.s32 7, %v1364
    %v1366 = vrot.slane %v1333, %v1365
    %v1375 = vmul.f32 %v1155, %v1338
    %v1376 = vmul.f32 %v1157, %v1338
    %v1377 = vmul.f32 %v1159, %v1342
    %v1378 = vmul.f32 %v1161, %v1342
    %v1379 = vmul.f32 %v1163, %v1346
    %v1380 = vmul.f32 %v1165, %v1346
    %v1381 = vmul.f32 %v1167, %v1350
    %v1382 = vmul.f32 %v1169, %v1350
    %v1383 = vmul.f32 %v1171, %v1354
    %v1384 = vmul.f32 %v1173, %v1354
    %v1385 = vmul.f32 %v1175, %v1358
    %v1386 = vmul.f32 %v1177, %v1358
    %v1387 = vmul.f32 %v1179, %v1362
    %v1388 = vmul.f32 %v1181, %v1362
    %v1389 = vmul.f32 %v1183, %v1366
    %v1390 = vmul.f32 %v1185, %v1366
    %1407 = vset.pattern.permute.xlu0 0
    %1408 = vperm.xlu0 %1407, %v1375
    %v1409 = vpop.permute.xlu0 %1408
    %1410 = vset.pattern.permute.xlu0 0
    %1411 = vperm.xlu0 %1410, %v1376
    %v1412 = vpop.permute.xlu0 %1411
    %1413 = vset.pattern.permute.xlu0 0
    %1414 = vperm.xlu0 %1413, %v1377
    %v1415 = vpop.permute.xlu0 %1414
    %1416 = vset.pattern.permute.xlu0 0
    %1417 = vperm.xlu0 %1416, %v1378
    %v1418 = vpop.permute.xlu0 %1417
    %1419 = vset.pattern.permute.xlu0 0
    %1420 = vperm.xlu0 %1419, %v1379
    %v1421 = vpop.permute.xlu0 %1420
    %1422 = vset.pattern.permute.xlu0 0
    %1423 = vperm.xlu0 %1422, %v1380
    %v1424 = vpop.permute.xlu0 %1423
    %1425 = vset.pattern.permute.xlu0 0
    %1426 = vperm.xlu0 %1425, %v1381
    %v1427 = vpop.permute.xlu0 %1426
    %1428 = vset.pattern.permute.xlu0 0
    %1429 = vperm.xlu0 %1428, %v1382
    %v1430 = vpop.permute.xlu0 %1429
    %1431 = vset.pattern.permute.xlu0 0
    %1432 = vperm.xlu0 %1431, %v1383
    %v1433 = vpop.permute.xlu0 %1432
    %1434 = vset.pattern.permute.xlu0 0
    %1435 = vperm.xlu0 %1434, %v1384
    %v1436 = vpop.permute.xlu0 %1435
    %1437 = vset.pattern.permute.xlu0 0
    %1438 = vperm.xlu0 %1437, %v1385
    %v1439 = vpop.permute.xlu0 %1438
    %1440 = vset.pattern.permute.xlu0 0
    %1441 = vperm.xlu0 %1440, %v1386
    %v1442 = vpop.permute.xlu0 %1441
    %1443 = vset.pattern.permute.xlu0 0
    %1444 = vperm.xlu0 %1443, %v1387
    %v1445 = vpop.permute.xlu0 %1444
    %1446 = vset.pattern.permute.xlu0 0
    %1447 = vperm.xlu0 %1446, %v1388
    %v1448 = vpop.permute.xlu0 %1447
    %1449 = vset.pattern.permute.xlu0 0
    %1450 = vperm.xlu0 %1449, %v1389
    %v1451 = vpop.permute.xlu0 %1450
    %1452 = vset.pattern.permute.xlu0 0
    %1453 = vperm.xlu0 %1452, %v1390
    %v1454 = vpop.permute.xlu0 %1453
    %v1455 = vlaneseq
    %v1456 = vshrl.u32 %v1455, 7
    %v1457 = vsub.s32 %v1003, %v1456
    %v1458 = vrot.slane %v1409, %v1457
    %v1459 = vlaneseq
    %v1460 = vshrl.u32 %v1459, 7
    %v1461 = vsub.s32 %v1008, %v1460
    %v1462 = vrot.slane %v1412, %v1461
    %v1463 = vsel %vm1013, %v1462, %v1458
    %v1464 = vlaneseq
    %v1465 = vshrl.u32 %v1464, 7
    %v1466 = vsub.s32 %v1003, %v1465
    %v1467 = vrot.slane %v1415, %v1466
    %v1468 = vlaneseq
    %v1469 = vshrl.u32 %v1468, 7
    %v1470 = vsub.s32 %v1008, %v1469
    %v1471 = vrot.slane %v1418, %v1470
    %v1472 = vsel %vm1013, %v1471, %v1467
    %v1473 = vlaneseq
    %v1474 = vshrl.u32 %v1473, 7
    %v1475 = vsub.s32 %v1003, %v1474
    %v1476 = vrot.slane %v1421, %v1475
    %v1477 = vlaneseq
    %v1478 = vshrl.u32 %v1477, 7
    %v1479 = vsub.s32 %v1008, %v1478
    %v1480 = vrot.slane %v1424, %v1479
    %v1481 = vsel %vm1013, %v1480, %v1476
    %v1482 = vlaneseq
    %v1483 = vshrl.u32 %v1482, 7
    %v1484 = vsub.s32 %v1003, %v1483
    %v1485 = vrot.slane %v1427, %v1484
    %v1486 = vlaneseq
    %v1487 = vshrl.u32 %v1486, 7
    %v1488 = vsub.s32 %v1008, %v1487
    %v1489 = vrot.slane %v1430, %v1488
    %v1490 = vsel %vm1013, %v1489, %v1485
    %v1491 = vlaneseq
    %v1492 = vshrl.u32 %v1491, 7
    %v1493 = vsub.s32 %v1003, %v1492
    %v1494 = vrot.slane %v1433, %v1493
    %v1495 = vlaneseq
    %v1496 = vshrl.u32 %v1495, 7
    %v1497 = vsub.s32 %v1008, %v1496
    %v1498 = vrot.slane %v1436, %v1497
    %v1499 = vsel %vm1013, %v1498, %v1494
    %v1500 = vlaneseq
    %v1501 = vshrl.u32 %v1500, 7
    %v1502 = vsub.s32 %v1003, %v1501
    %v1503 = vrot.slane %v1439, %v1502
    %v1504 = vlaneseq
    %v1505 = vshrl.u32 %v1504, 7
    %v1506 = vsub.s32 %v1008, %v1505
    %v1507 = vrot.slane %v1442, %v1506
    %v1508 = vsel %vm1013, %v1507, %v1503
    %v1509 = vlaneseq
    %v1510 = vshrl.u32 %v1509, 7
    %v1511 = vsub.s32 %v1003, %v1510
    %v1512 = vrot.slane %v1445, %v1511
    %v1513 = vlaneseq
    %v1514 = vshrl.u32 %v1513, 7
    %v1515 = vsub.s32 %v1008, %v1514
    %v1516 = vrot.slane %v1448, %v1515
    %v1517 = vsel %vm1013, %v1516, %v1512
    %v1518 = vlaneseq
    %v1519 = vshrl.u32 %v1518, 7
    %v1520 = vsub.s32 %v1003, %v1519
    %v1521 = vrot.slane %v1451, %v1520
    %v1522 = vlaneseq
    %v1523 = vshrl.u32 %v1522, 7
    %v1524 = vsub.s32 %v1008, %v1523
    %v1525 = vrot.slane %v1454, %v1524
    %v1526 = vsel %vm1013, %v1525, %v1521
    %v1527 = vsel %vm1078, %v1472, %v1463
    %v1528 = vsel %vm1080, %v1481, %v1527
    %v1529 = vsel %vm1082, %v1490, %v1528
    %v1530 = vsel %vm1084, %v1499, %v1529
    %v1531 = vsel %vm1086, %v1508, %v1530
    %v1532 = vsel %vm1088, %v1517, %v1531
    %v1533 = vsel %vm1090, %v1526, %v1532
    %1535 = vst.msk [vmem:[#allocation19] sm:$0xff] %vm1093, %v1533
    %v1552 = vmul.f32 %v1409, %v727
    %v1553 = vmul.f32 %v1412, %v728
    %v1554 = vmul.f32 %v1415, %v729
    %v1555 = vmul.f32 %v1418, %v730
    %v1556 = vmul.f32 %v1421, %v731
    %v1557 = vmul.f32 %v1424, %v732
    %v1558 = vmul.f32 %v1427, %v733
    %v1559 = vmul.f32 %v1430, %v734
    %v1560 = vmul.f32 %v1433, %v735
    %v1561 = vmul.f32 %v1436, %v736
    %v1562 = vmul.f32 %v1439, %v737
    %v1563 = vmul.f32 %v1442, %v738
    %v1564 = vmul.f32 %v1445, %v739
    %v1565 = vmul.f32 %v1448, %v740
    %v1566 = vmul.f32 %v1451, %v741
    %v1567 = vmul.f32 %v1454, %v742
    %v1568 = vadd.f32 %v1552, %v1553
    %v1569 = vrot.slane %v1568, 4
    %v1570 = vadd.f32 %v1568, %v1569
    %v1571 = vrot.slane %v1570, 2
    %v1572 = vadd.f32 %v1570, %v1571
    %v1573 = vrot.slane %v1572, 1
    %v1574 = vadd.f32 %v1572, %v1573
    %v1575 = vadd.f32 %v1554, %v1555
    %v1576 = vrot.slane %v1575, 4
    %v1577 = vadd.f32 %v1575, %v1576
    %v1578 = vrot.slane %v1577, 2
    %v1579 = vadd.f32 %v1577, %v1578
    %v1580 = vrot.slane %v1579, 1
    %v1581 = vadd.f32 %v1579, %v1580
    %v1582 = vadd.f32 %v1556, %v1557
    %v1583 = vrot.slane %v1582, 4
    %v1584 = vadd.f32 %v1582, %v1583
    %v1585 = vrot.slane %v1584, 2
    %v1586 = vadd.f32 %v1584, %v1585
    %v1587 = vrot.slane %v1586, 1
    %v1588 = vadd.f32 %v1586, %v1587
    %v1589 = vadd.f32 %v1558, %v1559
    %v1590 = vrot.slane %v1589, 4
    %v1591 = vadd.f32 %v1589, %v1590
    %v1592 = vrot.slane %v1591, 2
    %v1593 = vadd.f32 %v1591, %v1592
    %v1594 = vrot.slane %v1593, 1
    %v1595 = vadd.f32 %v1593, %v1594
    %v1596 = vadd.f32 %v1560, %v1561
    %v1597 = vrot.slane %v1596, 4
    %v1598 = vadd.f32 %v1596, %v1597
    %v1599 = vrot.slane %v1598, 2
    %v1600 = vadd.f32 %v1598, %v1599
    %v1601 = vrot.slane %v1600, 1
    %v1602 = vadd.f32 %v1600, %v1601
    %v1603 = vadd.f32 %v1562, %v1563
    %v1604 = vrot.slane %v1603, 4
    %v1605 = vadd.f32 %v1603, %v1604
    %v1606 = vrot.slane %v1605, 2
    %v1607 = vadd.f32 %v1605, %v1606
    %v1608 = vrot.slane %v1607, 1
    %v1609 = vadd.f32 %v1607, %v1608
    %v1610 = vadd.f32 %v1564, %v1565
    %v1611 = vrot.slane %v1610, 4
    %v1612 = vadd.f32 %v1610, %v1611
    %v1613 = vrot.slane %v1612, 2
    %v1614 = vadd.f32 %v1612, %v1613
    %v1615 = vrot.slane %v1614, 1
    %v1616 = vadd.f32 %v1614, %v1615
    %v1617 = vadd.f32 %v1566, %v1567
    %v1618 = vrot.slane %v1617, 4
    %v1619 = vadd.f32 %v1617, %v1618
    %v1620 = vrot.slane %v1619, 2
    %v1621 = vadd.f32 %v1619, %v1620
    %v1622 = vrot.slane %v1621, 1
    %v1623 = vadd.f32 %v1621, %v1622
    %v1624 = vpack.c.bf16 %v1574, %v1574
    %v1625 = vpack.c.bf16 %v1581, %v1581
    %v1626 = vpack.c.bf16 %v1588, %v1588
    %v1627 = vpack.c.bf16 %v1595, %v1595
    %v1628 = vpack.c.bf16 %v1602, %v1602
    %v1629 = vpack.c.bf16 %v1609, %v1609
    %v1630 = vpack.c.bf16 %v1616, %v1616
    %v1631 = vpack.c.bf16 %v1623, %v1623
    %v1632 = vld [vmem:[#allocation13] sm:$0xf]
    %v1633 = vld [vmem:[#allocation13 + $0x4] sm:$0xf]
    %v1634 = vld [vmem:[#allocation13 + $0x8] sm:$0xf]
    %v1635 = vld [vmem:[#allocation13 + $0xc] sm:$0xf]
    %v1636 = vld [vmem:[#allocation13 + $0x10] sm:$0xf]
    %v1637 = vld [vmem:[#allocation13 + $0x14] sm:$0xf]
    %v1638 = vld [vmem:[#allocation13 + $0x18] sm:$0xf]
    %v1639 = vld [vmem:[#allocation13 + $0x1c] sm:$0xf]
    %v1640 = vld [vmem:[#allocation13 + $0x20] sm:$0xf]
    %v1641 = vld [vmem:[#allocation13 + $0x24] sm:$0xf]
    %v1642 = vld [vmem:[#allocation13 + $0x28] sm:$0xf]
    %v1643 = vld [vmem:[#allocation13 + $0x2c] sm:$0xf]
    %v1644 = vld [vmem:[#allocation13 + $0x30] sm:$0xf]
    %v1645 = vld [vmem:[#allocation13 + $0x34] sm:$0xf]
    %v1646 = vld [vmem:[#allocation13 + $0x38] sm:$0xf]
    %v1647 = vld [vmem:[#allocation13 + $0x3c] sm:$0xf]
    %v1656 = vunpack.c.l.b16 %v1624
    %v1657 = vunpack.c.l.b16 %v1625
    %v1658 = vunpack.c.l.b16 %v1626
    %v1659 = vunpack.c.l.b16 %v1627
    %v1660 = vunpack.c.l.b16 %v1628
    %v1661 = vunpack.c.l.b16 %v1629
    %v1662 = vunpack.c.l.b16 %v1630
    %v1663 = vunpack.c.l.b16 %v1631
    %v1664 = vsel %vm1078, %v1657, %v1656
    %v1665 = vsel %vm1080, %v1658, %v1664
    %v1666 = vsel %vm1082, %v1659, %v1665
    %v1667 = vsel %vm1084, %v1660, %v1666
    %v1668 = vsel %vm1086, %v1661, %v1667
    %v1669 = vsel %vm1088, %v1662, %v1668
    %v1670 = vsel %vm1090, %v1663, %v1669
    %v1671 = vpack.c.b16 %v1670, %v1670
    %v1689 = vunpack.c.l.b16 %v1632
    %v1690 = vunpack.c.l.b16 %v1633
    %v1691 = vunpack.c.l.b16 %v1634
    %v1692 = vunpack.c.l.b16 %v1635
    %v1693 = vunpack.c.l.b16 %v1636
    %v1694 = vunpack.c.l.b16 %v1637
    %v1695 = vunpack.c.l.b16 %v1638
    %v1696 = vunpack.c.l.b16 %v1639
    %v1697 = vunpack.c.l.b16 %v1640
    %v1698 = vunpack.c.l.b16 %v1641
    %v1699 = vunpack.c.l.b16 %v1642
    %v1700 = vunpack.c.l.b16 %v1643
    %v1701 = vunpack.c.l.b16 %v1644
    %v1702 = vunpack.c.l.b16 %v1645
    %v1703 = vunpack.c.l.b16 %v1646
    %v1704 = vunpack.c.l.b16 %v1647
    %v1705 = vpack.c.b16 %v1690, %v1689
    %v1706 = vpack.c.b16 %v1692, %v1691
    %v1707 = vpack.c.b16 %v1694, %v1693
    %v1708 = vpack.c.b16 %v1696, %v1695
    %v1709 = vpack.c.b16 %v1698, %v1697
    %v1710 = vpack.c.b16 %v1700, %v1699
    %v1711 = vpack.c.b16 %v1702, %v1701
    %v1712 = vpack.c.b16 %v1704, %v1703
    %1721 = vmatprep.subr.bf16.mxu0 0
    %1722 = vmatpush1.bf16.msra.mxu0 %v1712
    %1723 = vmatprep.subr.bf16.mxu0 0
    %1724 = vmatpush1.bf16.msra.mxu0 %v1711
    %1725 = vmatprep.subr.bf16.mxu0 0
    %1726 = vmatpush1.bf16.msra.mxu0 %v1710
    %1727 = vmatprep.subr.bf16.mxu0 0
    %1728 = vmatpush1.bf16.msra.mxu0 %v1709
    %1729 = vmatprep.subr.bf16.mxu0 0
    %1730 = vmatpush1.bf16.msra.mxu0 %v1708
    %1731 = vmatprep.subr.bf16.mxu0 0
    %1732 = vmatpush1.bf16.msra.mxu0 %v1707
    %1733 = vmatprep.subr.bf16.mxu0 0
    %1734 = vmatpush1.bf16.msra.mxu0 %v1706
    %1735 = vmatprep.subr.bf16.mxu0 0
    %1736 = vmatpush1.bf16.msra.mxu0 %v1705
    %1737 = vmatprep.subr.bf16.mxu0 0
    %1738 = vmatpush2.bf16.msra.mxu0 0
    %1739 = vmatprep.subr.bf16.mxu0 0
    %1740 = vmatpush2.bf16.msra.mxu0 0
    %1741 = vmatprep.subr.bf16.mxu0 0
    %1742 = vmatpush2.bf16.msra.mxu0 0
    %1743 = vmatprep.subr.bf16.mxu0 0
    %1744 = vmatpush2.bf16.msra.mxu0 0
    %1745 = vmatprep.subr.bf16.mxu0 0
    %1746 = vmatpush2.bf16.msra.mxu0 0
    %1747 = vmatprep.subr.bf16.mxu0 0
    %1748 = vmatpush2.bf16.msra.mxu0 0
    %1749 = vmatprep.subr.bf16.mxu0 0
    %1750 = vmatpush2.bf16.msra.mxu0 0
    %1751 = vmatprep.subr.bf16.mxu0 0
    %1752 = vmatpush2.bf16.msra.mxu0 0
    %1753 = vmatprep.mubr.bf16.mxu0 0
    %1754 = vmatmul.mubr.bf16.gmra.mxu0 %v1671
    %v1755 = vpop.f32.mrf.mxu0
    %v1756 = vadd.f32 0.0, %v1755
    %v1757 = vpop.f32.mrf.mxu0
    %v1758 = vpop.f32.mrf.mxu0
    %v1759 = vpop.f32.mrf.mxu0
    %1760 = vdwg.mxu0
    %v1761 = vadd.f32 %v713, %v1756
    %v1762 = vld [vmem:[%s11] sm:$0x1]
    %v1764 = vlaneseq
    %v1765 = vshrl.u32 %v1764, 7
    %v1766 = vsub.s32 0, %v1765
    %v1767 = vrot.slane %v1762, %v1766
    %v1769 = vadd.f32 %v1761, %v1767
    %v1770 = vtanh.pop %v1769
    %v1771 = vpack.c.bf16 %v1770, %v1770
    %v1772 = vld [vmem:[#allocation14] sm:$0xf]
    %v1773 = vld [vmem:[#allocation14 + $0x4] sm:$0xf]
    %v1774 = vld [vmem:[#allocation14 + $0x8] sm:$0xf]
    %v1775 = vld [vmem:[#allocation14 + $0xc] sm:$0xf]
    %v1776 = vld [vmem:[#allocation14 + $0x10] sm:$0xf]
    %v1777 = vld [vmem:[#allocation14 + $0x14] sm:$0xf]
    %v1778 = vld [vmem:[#allocation14 + $0x18] sm:$0xf]
    %v1779 = vld [vmem:[#allocation14 + $0x1c] sm:$0xf]
    %v1780 = vld [vmem:[#allocation14 + $0x20] sm:$0xf]
    %v1781 = vld [vmem:[#allocation14 + $0x24] sm:$0xf]
    %v1782 = vld [vmem:[#allocation14 + $0x28] sm:$0xf]
    %v1783 = vld [vmem:[#allocation14 + $0x2c] sm:$0xf]
    %v1784 = vld [vmem:[#allocation14 + $0x30] sm:$0xf]
    %v1785 = vld [vmem:[#allocation14 + $0x34] sm:$0xf]
    %v1786 = vld [vmem:[#allocation14 + $0x38] sm:$0xf]
    %v1787 = vld [vmem:[#allocation14 + $0x3c] sm:$0xf]
    %v1788 = vld [vmem:[%s13] sm:$0x1]
    %v1790 = vlaneseq
    %v1791 = vshrl.u32 %v1790, 7
    %v1792 = vsub.s32 0, %v1791
    %v1793 = vrot.slane %v1788, %v1792
    %v1811 = vunpack.c.l.b16 %v1772
    %v1812 = vunpack.c.l.b16 %v1773
    %v1813 = vunpack.c.l.b16 %v1774
    %v1814 = vunpack.c.l.b16 %v1775
    %v1815 = vunpack.c.l.b16 %v1776
    %v1816 = vunpack.c.l.b16 %v1777
    %v1817 = vunpack.c.l.b16 %v1778
    %v1818 = vunpack.c.l.b16 %v1779
    %v1819 = vunpack.c.l.b16 %v1780
    %v1820 = vunpack.c.l.b16 %v1781
    %v1821 = vunpack.c.l.b16 %v1782
    %v1822 = vunpack.c.l.b16 %v1783
    %v1823 = vunpack.c.l.b16 %v1784
    %v1824 = vunpack.c.l.b16 %v1785
    %v1825 = vunpack.c.l.b16 %v1786
    %v1826 = vunpack.c.l.b16 %v1787
    %v1827 = vpack.c.b16 %v1812, %v1811
    %v1828 = vpack.c.b16 %v1814, %v1813
    %v1829 = vpack.c.b16 %v1816, %v1815
    %v1830 = vpack.c.b16 %v1818, %v1817
    %v1831 = vpack.c.b16 %v1820, %v1819
    %v1832 = vpack.c.b16 %v1822, %v1821
    %v1833 = vpack.c.b16 %v1824, %v1823
    %v1834 = vpack.c.b16 %v1826, %v1825
    %1843 = vmatprep.subr.bf16.mxu0 0
    %1844 = vmatpush1.bf16.msra.mxu0 %v1834
    %1845 = vmatprep.subr.bf16.mxu0 0
    %1846 = vmatpush1.bf16.msra.mxu0 %v1833
    %1847 = vmatprep.subr.bf16.mxu0 0
    %1848 = vmatpush1.bf16.msra.mxu0 %v1832
    %1849 = vmatprep.subr.bf16.mxu0 0
    %1850 = vmatpush1.bf16.msra.mxu0 %v1831
    %1851 = vmatprep.subr.bf16.mxu0 0
    %1852 = vmatpush1.bf16.msra.mxu0 %v1830
    %1853 = vmatprep.subr.bf16.mxu0 0
    %1854 = vmatpush1.bf16.msra.mxu0 %v1829
    %1855 = vmatprep.subr.bf16.mxu0 0
    %1856 = vmatpush1.bf16.msra.mxu0 %v1828
    %1857 = vmatprep.subr.bf16.mxu0 0
    %1858 = vmatpush1.bf16.msra.mxu0 %v1827
    %1859 = vmatprep.subr.bf16.mxu0 0
    %1860 = vmatpush2.bf16.msra.mxu0 0
    %1861 = vmatprep.subr.bf16.mxu0 0
    %1862 = vmatpush2.bf16.msra.mxu0 0
    %1863 = vmatprep.subr.bf16.mxu0 0
    %1864 = vmatpush2.bf16.msra.mxu0 0
    %1865 = vmatprep.subr.bf16.mxu0 0
    %1866 = vmatpush2.bf16.msra.mxu0 0
    %1867 = vmatprep.subr.bf16.mxu0 0
    %1868 = vmatpush2.bf16.msra.mxu0 0
    %1869 = vmatprep.subr.bf16.mxu0 0
    %1870 = vmatpush2.bf16.msra.mxu0 0
    %1871 = vmatprep.subr.bf16.mxu0 0
    %1872 = vmatpush2.bf16.msra.mxu0 0
    %1873 = vmatprep.subr.bf16.mxu0 0
    %1874 = vmatpush2.bf16.msra.mxu0 0
    %1875 = vmatprep.mubr.bf16.mxu0 0
    %1876 = vmatmul.mubr.bf16.gmra.mxu0 %v1771
    %v1877 = vpop.f32.mrf.mxu0
    %v1878 = vadd.f32 %v1793, %v1877
    %v1879 = vpop.f32.mrf.mxu0
    %v1880 = vpop.f32.mrf.mxu0
    %v1881 = vpop.f32.mrf.mxu0
    %1882 = vdwg.mxu0
    %1883 = vmax.xlane.f32.xlu0 %v1878
    %v1884 = vpop.xlane.xlu0 %1883
    %v1885 = vsub.f32 %v1878, %v1884
    %v1886 = vmul.f32 %v1885, 1.442695
    %v1887 = vpow.pop %v1886
    %1888 = vadd.xlane.f32.xlu0 %v1887
    %v1889 = vpop.xlane.xlu0 %1888
    %v1890 = vlog2.pop %v1889
    %v1891 = vmul.f32 %v1890, 0.6931472
    %v1892 = vsub.f32 %v1885, %v1891
    %1893 = vst [vmem:[#allocation16] sm:$0xff] %v1892
    // Predicated region
    $region90: #{tpu_custom_call.1} parent=1 // pred_check
      _
    $region91: #{tpu_custom_call.1} parent=1 // pred_check_branch
      %1895 = sbr.rel (0) target = $region93
    $region92: #{tpu_custom_call.1} parent=1 // pred_region
      %s1897 = ssub.s32 128, 128
      %1898 = vsyncadd [#allocation4], %s1897
      %s1900 = sshll.u32 [#allocation16], 4
      %s1901 = int_to_ptr.vmem [resolvable:$true] %s1900
      %1903 = dma.vmem_to_hbm [thread:$0]  %s1901, 128, %s14, [#allocation4]
    $region93: #{tpu_custom_call.1} parent=1 // pred_fallthru
      _
    // Predicated region
    $region94: #{tpu_custom_call.1} parent=1 // pred_check
      _
    $region95: #{tpu_custom_call.1} parent=1 // pred_check_branch
      %1905 = sbr.rel (0) target = $region97
    $region96: #{tpu_custom_call.1} parent=1 // pred_region
      %s1907 = ssub.s32 128, 128
      %1908 = vsyncadd [#allocation18], %s1907
      %s1910 = sshll.u32 [#allocation17], 4
      %s1911 = int_to_ptr.vmem [resolvable:$true] %s1910
      %1913 = dma.vmem_to_hbm [thread:$0]  %s1911, 128, %s15, [#allocation18]
    $region97: #{tpu_custom_call.1} parent=1 // pred_fallthru
      _
    // Predicated region
    $region98: #{tpu_custom_call.1} parent=1 // pred_check
      _
    $region99: #{tpu_custom_call.1} parent=1 // pred_check_branch
      %1915 = sbr.rel (0) target = $region101
    $region100: #{tpu_custom_call.1} parent=1 // pred_region
      %s1917 = ssub.s32 128, 128
      %1918 = vsyncadd [#allocation18], %s1917
      %s1920 = sshll.u32 [#allocation19], 4
      %s1921 = int_to_ptr.vmem [resolvable:$true] %s1920
      %1923 = dma.vmem_to_hbm [thread:$0]  %s1921, 128, %s16, [#allocation18]
    $region101: #{tpu_custom_call.1} parent=1 // pred_fallthru
      _
    // Predicated region
    $region102: #{tpu_custom_call.1} parent=1 // pred_check
      _
    $region103: #{tpu_custom_call.1} parent=1 // pred_check_branch
      %1925 = sbr.rel (0) target = $region105
    $region104: #{tpu_custom_call.1} parent=1 // pred_region
      %1926 = dma.done [#allocation4], 128
    $region105: #{tpu_custom_call.1} parent=1 // pred_fallthru
      _
    // Predicated region
    $region106: #{tpu_custom_call.1} parent=1 // pred_check
      _
    $region107: #{tpu_custom_call.1} parent=1 // pred_check_branch
      %1928 = sbr.rel (0) target = $region109
    $region108: #{tpu_custom_call.1} parent=1 // pred_region
      %1929 = dma.done [#allocation18], 128
    $region109: #{tpu_custom_call.1} parent=1 // pred_fallthru
      _
    // Predicated region
    $region110: #{tpu_custom_call.1} parent=1 // pred_check
      _
    $region111: #{tpu_custom_call.1} parent=1 // pred_check_branch
      %1931 = sbr.rel (0) target = $region113
    $region112: #{tpu_custom_call.1} parent=1 // pred_region
      %1932 = dma.done [#allocation18], 128
    $region113: #{tpu_custom_call.1} parent=1 // pred_fallthru
      _
    %1933 = vsyncpa [#allocation3], 1
    %1934 = vsyncpa [#allocation6], 1
    %1935 = vsyncpa [#allocation9], 1
    %1936 = vsyncpa [#allocation12], 1
    %1937 = vsyncpa [#allocation15], 1
    %1938 = vsyncpa [#allocation4], 1
    %1939 = vsyncpa [#allocation18], 1

</llo_original>
